<compile_context>
chip_gen: v5e
topology: v5e:2x2
jax: 0.10.0
libtpu: 0.0.40
codegen_flags: <defaults>
</compile_context>

<pallas_src>
import math
from functools import partial

import jax
import jax.numpy as jnp
from jax.experimental import pallas as pl
from jax.experimental.pallas import tpu as pltpu

LANE = 128                       # lane width: pad feature dims to this
DEF_TILE_M = 512                 # pooled-pixel rows per conv grid step
DEF_TILE_B = 128                 # batch rows per MLP grid step
VMEM_LIMIT = 32 * 1024 * 1024    # explicit scoped-VMEM budget (safe on v7x too)


def _round_up(x, m):
    return (x + m - 1) // m * m


# ----------------------------------------------------------------------------
# Pallas kernels
# ----------------------------------------------------------------------------
def conv_pool_relu_kernel(p_ref, w_ref, b_ref, o_ref):
    """conv (im2col matmul) + 2x2 max-pool + bias + ReLU, single MXU call.

    p_ref: (4, TM, K)  bf16  patches, one slab per pool offset
    w_ref: (K, Npad)   bf16  conv weight, zero-padded to 128 lanes
    b_ref: (1, Npad)   f32   conv bias (zero-padded)
    o_ref: (TM, Npad)  bf16  pooled + ReLU'd activations
    """
    n_off, tm, _ = p_ref.shape
    # One long MXU push: stack the 4 pool offsets along the row (sublane) dim.
    lhs = jnp.concatenate([p_ref[i] for i in range(n_off)], axis=0)     # (4*TM, K)
    y = jnp.dot(lhs, w_ref[...], preferred_element_type=jnp.float32)   # (4*TM, Npad)
    # 2x2 max-pool == max over the 4 offsets; bias once after the max
    # (max(x + b) == max(x) + b for a per-channel constant).
    acc = y[0:tm]
    for i in range(1, n_off):
        acc = jnp.maximum(acc, y[i * tm:(i + 1) * tm])
    o_ref[...] = jnp.maximum(acc + b_ref[...], 0.0).astype(o_ref.dtype)


def mlp_head_kernel(x_ref, w1_ref, b1_ref, w2_ref, b2_ref, o_ref, *, n_valid):
    """fc1 + ReLU + (dropout: identity) + fc2 + masked log_softmax.

    x_ref:  (TB, 320)    bf16
    w1_ref: (320, Hpad)  bf16    b1_ref: (1, Hpad) f32
    w2_ref: (Hpad, Cpad) bf16    b2_ref: (1, Cpad) f32
    o_ref:  (TB, Cpad)   f32     (only the first n_valid lanes are real classes)
    """
    h = jnp.dot(x_ref[...], w1_ref[...], preferred_element_type=jnp.float32)
    h = jnp.maximum(h + b1_ref[...], 0.0)
    # TODO(synk): F.dropout(training=True) omitted (eval-mode identity).
    logits = jnp.dot(h.astype(w2_ref.dtype), w2_ref[...],
                     preferred_element_type=jnp.float32) + b2_ref[...]
    # Mask padded class lanes so they do not perturb the softmax.
    col = jax.lax.broadcasted_iota(jnp.int32, logits.shape, 1)
    valid = col < n_valid
    logits = jnp.where(valid, logits, -1e30)
    m = jnp.max(logits, axis=-1, keepdims=True)
    z = logits - m
    lse = jnp.log(jnp.sum(jnp.where(valid, jnp.exp(z), 0.0),
                          axis=-1, keepdims=True))
    o_ref[...] = jnp.where(valid, z - lse, 0.0)


# ----------------------------------------------------------------------------
# Wrappers around pallas_call
# ----------------------------------------------------------------------------
def conv_pool_relu(patches, w_mat, bias, *, tile_m=DEF_TILE_M):
    """patches (4, M, K) -> pooled/ReLU'd activations (M, N) (bf16)."""
    n_off, M, K = patches.shape
    N = w_mat.shape[1]
    n_pad = _round_up(N, LANE)
    tile_m = min(tile_m, _round_up(M, 8))
    m_pad = _round_up(M, tile_m)

    p = jnp.pad(patches, ((0, 0), (0, m_pad - M), (0, 0))).astype(jnp.bfloat16)
    w = jnp.pad(w_mat, ((0, 0), (0, n_pad - N))).astype(jnp.bfloat16)
    b = jnp.pad(bias.reshape(1, -1), ((0, 0), (0, n_pad - N))).astype(jnp.float32)

    out = pl.pallas_call(
        conv_pool_relu_kernel,
        out_shape=jax.ShapeDtypeStruct((m_pad, n_pad), jnp.bfloat16),
        grid=(m_pad // tile_m,),
        in_specs=[
            pl.BlockSpec((n_off, tile_m, K), lambda i: (0, i, 0)),
            pl.BlockSpec((K, n_pad), lambda i: (0, 0)),
            pl.BlockSpec((1, n_pad), lambda i: (0, 0)),
        ],
        out_specs=pl.BlockSpec((tile_m, n_pad), lambda i: (i, 0)),
        compiler_params=pltpu.CompilerParams(
            dimension_semantics=("parallel",),
            vmem_limit_bytes=VMEM_LIMIT),
        cost_estimate=pl.CostEstimate(
            flops=2 * n_off * m_pad * K * n_pad,
            transcendentals=0,
            bytes_accessed=p.size * 2 + w.size * 2 + b.size * 4
                           + m_pad * n_pad * 2),
    )(p, w, b)
    return out[:M, :N]                      # drop the row / lane padding


def mlp_head(x_flat, w1, b1, w2, b2, *, tile_b=DEF_TILE_B):
    """(B, 320) -> (B, num_classes) log-probabilities (f32)."""
    B, K1 = x_flat.shape
    H, C = w1.shape[1], w2.shape[1]
    h_pad, c_pad = _round_up(H, LANE), _round_up(C, LANE)
    tile_b = min(tile_b, _round_up(B, 8))
    b_pad = _round_up(B, tile_b)

    x = jnp.pad(x_flat, ((0, b_pad - B), (0, 0))).astype(jnp.bfloat16)
    w1p = jnp.pad(w1, ((0, 0), (0, h_pad - H))).astype(jnp.bfloat16)
    b1p = jnp.pad(b1.reshape(1, -1), ((0, 0), (0, h_pad - H))).astype(jnp.float32)
    w2p = jnp.pad(w2, ((0, h_pad - H), (0, c_pad - C))).astype(jnp.bfloat16)
    b2p = jnp.pad(b2.reshape(1, -1), ((0, 0), (0, c_pad - C))).astype(jnp.float32)

    out = pl.pallas_call(
        partial(mlp_head_kernel, n_valid=C),
        out_shape=jax.ShapeDtypeStruct((b_pad, c_pad), jnp.float32),
        grid=(b_pad // tile_b,),
        in_specs=[
            pl.BlockSpec((tile_b, K1), lambda i: (i, 0)),
            pl.BlockSpec((K1, h_pad), lambda i: (0, 0)),
            pl.BlockSpec((1, h_pad), lambda i: (0, 0)),
            pl.BlockSpec((h_pad, c_pad), lambda i: (0, 0)),
            pl.BlockSpec((1, c_pad), lambda i: (0, 0)),
        ],
        out_specs=pl.BlockSpec((tile_b, c_pad), lambda i: (i, 0)),
        compiler_params=pltpu.CompilerParams(
            dimension_semantics=("parallel",),
            vmem_limit_bytes=VMEM_LIMIT),
        cost_estimate=pl.CostEstimate(
            flops=2 * b_pad * (K1 * h_pad + h_pad * c_pad),
            transcendentals=b_pad * c_pad,
            bytes_accessed=x.size * 2 + w1p.size * 2 + w2p.size * 2
                           + b1p.size * 4 + b2p.size * 4 + b_pad * c_pad * 4),
    )(x, w1p, b1p, w2p, b2p)
    return out[:B, :C]


# ----------------------------------------------------------------------------
# Glue: pool-folded im2col (plain JAX; pure slicing/stacking, no MACs here)
# ----------------------------------------------------------------------------
def im2col_pooled(x_nhwc, ksize=5, pool=2):
    """Return patches (pool*pool, B*Hp*Wp, Cin*ksize*ksize) and (B, Hp, Wp).

    patches[off, b*Hp*Wp + i*Wp + j, c*ksize*ksize + kh*ksize + kw]
        = x[b, pool*i + ph + kh, pool*j + pw + kw, c],  off = ph*pool + pw
    which matches the torch conv-weight flattening order (cin, kh, kw).
    """
    B, H, W, C = x_nhwc.shape
    Ho, Wo = H - ksize + 1, W - ksize + 1
    Hp, Wp = Ho // pool, Wo // pool
    offsets = []
    for ph in range(pool):
        for pw in range(pool):
            taps = []
            for kh in range(ksize):
                for kw in range(ksize):
                    sl = jax.lax.slice(
                        x_nhwc,
                        (0, ph + kh, pw + kw, 0),
                        (B, ph + kh + pool * (Hp - 1) + 1,
                         pw + kw + pool * (Wp - 1) + 1, C),
                        (1, pool, pool, 1))            # (B, Hp, Wp, C)
                    taps.append(sl)
            p = jnp.stack(taps, axis=-1)               # (B, Hp, Wp, C, K*K)
            p = p.reshape(B * Hp * Wp, C * ksize * ksize)
            offsets.append(p)
    return jnp.stack(offsets, axis=0), (B, Hp, Wp)


# ----------------------------------------------------------------------------
# Full forward pass (Pallas path)
# ----------------------------------------------------------------------------
def cnn_mnist_forward(x_nchw, params):
    (c1_w, c1_b, c2_w, c2_b, f1_w, f1_b, f2_w, f2_b) = params
    x = jnp.transpose(x_nchw, (0, 2, 3, 1)).astype(jnp.float32)   # NCHW -> NHWC

    # conv1 (1->10, k=5) + maxpool2 + relu
    p1, (B, Hp1, Wp1) = im2col_pooled(x.astype(jnp.bfloat16), ksize=5, pool=2)
    w1m = c1_w.reshape(c1_w.shape[0], -1).T                       # (Cin*25, 10)
    y1 = conv_pool_relu(p1, w1m, c1_b)                            # (B*12*12, 10) bf16
    y1 = y1.reshape(B, Hp1, Wp1, c1_w.shape[0])

    # conv2 (10->20, k=5) + [Dropout2d: identity in eval] + maxpool2 + relu
    p2, (B, Hp2, Wp2) = im2col_pooled(y1, ksize=5, pool=2)
    w2m = c2_w.reshape(c2_w.shape[0], -1).T                       # (10*25, 20)
    y2 = conv_pool_relu(p2, w2m, c2_b)                            # (B*4*4, 20) bf16

    # Torch's NCHW flatten, folded into a row permutation of the fc1 weight:
    # y2 rows are (b, i, j) with channels on lanes, so a plain reshape gives
    # flat_nhwc[b, r*C2 + c] (r = i*Wp2 + j); permuting fc1's rows makes
    # flat_nhwc @ f1_w_perm == flat_torch @ f1_w (no activation transpose).
    C2, HW = c2_w.shape[0], Hp2 * Wp2
    flat = y2.reshape(B, HW * C2)                                 # (B, 320)
    p_idx = jnp.arange(HW * C2)
    f1_w_perm = f1_w[(p_idx % C2) * HW + p_idx // C2, :]

    # fc1 + relu + (dropout identity) + fc2 + log_softmax, fused kernel
    return mlp_head(flat, f1_w_perm, f1_b, f2_w, f2_b)            # (B, num_classes)


# ----------------------------------------------------------------------------
# Pure-JAX f32 reference (for correctness check only)
# ----------------------------------------------------------------------------
def reference_forward(x_nchw, params):
    (c1_w, c1_b, c2_w, c2_b, f1_w, f1_b, f2_w, f2_b) = params
    hi = jax.lax.Precision.HIGHEST
    dn = ("NCHW", "OIHW", "NCHW")

    def maxpool2(z):
        return jax.lax.reduce_window(z, -jnp.inf, jax.lax.max,
                                     (1, 1, 2, 2), (1, 1, 2, 2), "VALID")

    y = jax.lax.conv_general_dilated(x_nchw, c1_w, (1, 1), "VALID",
                                     dimension_numbers=dn, precision=hi)
    y = jnp.maximum(maxpool2(y + c1_b[None, :, None, None]), 0.0)
    y = jax.lax.conv_general_dilated(y, c2_w, (1, 1), "VALID",
                                     dimension_numbers=dn, precision=hi)
    y = jnp.maximum(maxpool2(y + c2_b[None, :, None, None]), 0.0)
    y = y.reshape(y.shape[0], -1)
    h = jnp.maximum(jnp.dot(y, f1_w, precision=hi) + f1_b, 0.0)
    logits = jnp.dot(h, f2_w, precision=hi) + f2_b
    return jax.nn.log_softmax(logits, axis=1)


# ----------------------------------------------------------------------------
if __name__ == "__main__":
    num_channels, num_classes = 1, 10   # args.num_channels / args.num_classes
    B, H, W = 2, 28, 28                 # 28x28 so flatten gives 20*4*4 = 320

    key = jax.random.PRNGKey(0)
    ks = jax.random.split(key, 9)

    def uinit(k, shape, fan_in):
        bound = 1.0 / math.sqrt(fan_in)
        return jax.random.uniform(k, shape, jnp.float32, -bound, bound)

    params = (
        uinit(ks[0], (10, num_channels, 5, 5), num_channels * 25),  # conv1.weight
        uinit(ks[1], (10,), num_channels * 25),                     # conv1.bias
        uinit(ks[2], (20, 10, 5, 5), 10 * 25),                      # conv2.weight
        uinit(ks[3], (20,), 10 * 25),                               # conv2.bias
        uinit(ks[4], (320, 50), 320),                               # fc1.weight^T (in, out)
        uinit(ks[5], (50,), 320),                                   # fc1.bias
        uinit(ks[6], (50, num_classes), 50),                        # fc2.weight^T (in, out)
        uinit(ks[7], (num_classes,), 50),                           # fc2.bias
    )
    x = jax.random.uniform(ks[8], (B, num_channels, H, W), jnp.float32)

    out = jax.jit(cnn_mnist_forward)(x, params)
    out = jax.block_until_ready(out)

    ref = jax.block_until_ready(reference_forward(x, params))
    assert out.shape == (B, num_classes)
    # rows of exp(log_softmax) must sum to 1
    assert bool(jnp.allclose(jnp.sum(jnp.exp(out), axis=1), 1.0, atol=1e-4))
    # bf16 MXU operands vs f32 reference -> slightly looser tolerance
    assert bool(jnp.allclose(out, ref, atol=2e-2, rtol=2e-2)), (
        f"max abs diff = {float(jnp.max(jnp.abs(out - ref)))}")

    print("KERNEL_OK")
</pallas_src>

<mosaic_0001>
module attributes {stable_mosaic.version = 11 : i64} {
  func.func @conv_pool_relu_kernel(%arg0: i32, %arg1: memref<4x288x25xbf16, #tpu.memory_space<vmem>>, %arg2: memref<25x128xbf16, #tpu.memory_space<vmem>>, %arg3: memref<1x128xf32, #tpu.memory_space<vmem>>, %arg4: memref<288x128xbf16, #tpu.memory_space<vmem>>) attributes {dimension_semantics = [#tpu.dimension_semantics<parallel>], iteration_bounds = array<i64: 1>, scalar_prefetch = 0 : i64, scratch_operands = 0 : i64, tpu.core_type = #tpu.core_type<tc>, window_params = [{transform_indices = @transform_0, window_bounds = array<i64: 4, 288, 25>}, {pipeline_mode = #tpu.pipeline_mode<synchronous>, transform_indices = @transform_1, window_bounds = array<i64: 25, 128>}, {pipeline_mode = #tpu.pipeline_mode<synchronous>, transform_indices = @transform_2, window_bounds = array<i64: 1, 128>}, {transform_indices = @transform_3, window_bounds = array<i64: 288, 128>}]} {
    %c0 = arith.constant 0 : index
    %c0_0 = arith.constant 0 : index
    %c0_1 = arith.constant 0 : index
    %0 = vector.load %arg1[%c0, %c0_0, %c0_1] : memref<4x288x25xbf16, #tpu.memory_space<vmem>>, vector<1x288x25xbf16>
    %1 = vector.shape_cast %0 : vector<1x288x25xbf16> to vector<288x25xbf16>
    %c1 = arith.constant 1 : index
    %c0_2 = arith.constant 0 : index
    %c0_3 = arith.constant 0 : index
    %2 = vector.load %arg1[%c1, %c0_2, %c0_3] : memref<4x288x25xbf16, #tpu.memory_space<vmem>>, vector<1x288x25xbf16>
    %3 = vector.shape_cast %2 : vector<1x288x25xbf16> to vector<288x25xbf16>
    %c2 = arith.constant 2 : index
    %c0_4 = arith.constant 0 : index
    %c0_5 = arith.constant 0 : index
    %4 = vector.load %arg1[%c2, %c0_4, %c0_5] : memref<4x288x25xbf16, #tpu.memory_space<vmem>>, vector<1x288x25xbf16>
    %5 = vector.shape_cast %4 : vector<1x288x25xbf16> to vector<288x25xbf16>
    %c3 = arith.constant 3 : index
    %c0_6 = arith.constant 0 : index
    %c0_7 = arith.constant 0 : index
    %6 = vector.load %arg1[%c3, %c0_6, %c0_7] : memref<4x288x25xbf16, #tpu.memory_space<vmem>>, vector<1x288x25xbf16>
    %7 = vector.shape_cast %6 : vector<1x288x25xbf16> to vector<288x25xbf16>
    %8 = tpu.concatenate %1, %3, %5, %7 in 0 : vector<288x25xbf16>, vector<288x25xbf16>, vector<288x25xbf16>, vector<288x25xbf16> -> vector<1152x25xbf16>
    %c0_8 = arith.constant 0 : index
    %c0_9 = arith.constant 0 : index
    %9 = vector.load %arg2[%c0_8, %c0_9] : memref<25x128xbf16, #tpu.memory_space<vmem>>, vector<25x128xbf16>
    %cst = arith.constant dense<0.000000e+00> : vector<1152x128xf32>
    %10 = tpu.matmul %8, %9, %cst {dimension_numbers = #tpu.dot_dimension_numbers<[1], [0], [0], [1], [0, 0, 1, 1], [], []>} : vector<1152x25xbf16>, vector<25x128xbf16>, vector<1152x128xf32> -> vector<1152x128xf32>
    %11 = vector.extract_strided_slice %10 {offsets = [0, 0], sizes = [288, 128], strides = [1, 1]} : vector<1152x128xf32> to vector<288x128xf32>
    %12 = vector.extract_strided_slice %10 {offsets = [288, 0], sizes = [288, 128], strides = [1, 1]} : vector<1152x128xf32> to vector<288x128xf32>
    %13 = arith.maximumf %11, %12 : vector<288x128xf32>
    %14 = vector.extract_strided_slice %10 {offsets = [576, 0], sizes = [288, 128], strides = [1, 1]} : vector<1152x128xf32> to vector<288x128xf32>
    %15 = arith.maximumf %13, %14 : vector<288x128xf32>
    %16 = vector.extract_strided_slice %10 {offsets = [864, 0], sizes = [288, 128], strides = [1, 1]} : vector<1152x128xf32> to vector<288x128xf32>
    %17 = arith.maximumf %15, %16 : vector<288x128xf32>
    %c0_10 = arith.constant 0 : index
    %c0_11 = arith.constant 0 : index
    %18 = vector.load %arg3[%c0_10, %c0_11] : memref<1x128xf32, #tpu.memory_space<vmem>>, vector<1x128xf32>
    %19 = vector.broadcast %18 : vector<1x128xf32> to vector<288x128xf32>
    %20 = arith.addf %17, %19 : vector<288x128xf32>
    %cst_12 = arith.constant 0.000000e+00 : f32
    %21 = vector.broadcast %cst_12 : f32 to vector<288x128xf32>
    %22 = arith.maximumf %20, %21 : vector<288x128xf32>
    %23 = arith.truncf %22 : vector<288x128xf32> to vector<288x128xbf16>
    %c0_13 = arith.constant 0 : index
    %c0_14 = arith.constant 0 : index
    %24 = vector.load %arg4[%c0_13, %c0_14] : memref<288x128xbf16, #tpu.memory_space<vmem>>, vector<288x128xbf16>
    tpu.vector_store %arg4[%c0_13, %c0_14], %23 {strides = array<i32>} : memref<288x128xbf16, #tpu.memory_space<vmem>>, vector<288x128xbf16>,
    return
  }
  func.func @transform_0(%arg0: i32) -> (i32, i32, i32) {
    %c0_i32 = arith.constant 0 : i32
    %c0_i32_0 = arith.constant 0 : i32
    %c0_i32_1 = arith.constant 0 : i32
    return %c0_i32, %arg0, %c0_i32_0 : i32, i32, i32
  }
  func.func @transform_1(%arg0: i32) -> (i32, i32) {
    %c0_i32 = arith.constant 0 : i32
    %c0_i32_0 = arith.constant 0 : i32
    %c0_i32_1 = arith.constant 0 : i32
    return %c0_i32, %c0_i32_0 : i32, i32
  }
  func.func @transform_2(%arg0: i32) -> (i32, i32) {
    %c0_i32 = arith.constant 0 : i32
    %c0_i32_0 = arith.constant 0 : i32
    %c0_i32_1 = arith.constant 0 : i32
    return %c0_i32, %c0_i32_0 : i32, i32
  }
  func.func @transform_3(%arg0: i32) -> (i32, i32) {
    %c0_i32 = arith.constant 0 : i32
    %c0_i32_0 = arith.constant 0 : i32
    return %arg0, %c0_i32 : i32, i32
  }
}

module attributes {stable_mosaic.version = 11 : i64} {
  func.func @conv_pool_relu_kernel(%arg0: i32, %arg1: memref<4x32x250xbf16, #tpu.memory_space<vmem>>, %arg2: memref<250x128xbf16, #tpu.memory_space<vmem>>, %arg3: memref<1x128xf32, #tpu.memory_space<vmem>>, %arg4: memref<32x128xbf16, #tpu.memory_space<vmem>>) attributes {dimension_semantics = [#tpu.dimension_semantics<parallel>], iteration_bounds = array<i64: 1>, scalar_prefetch = 0 : i64, scratch_operands = 0 : i64, tpu.core_type = #tpu.core_type<tc>, window_params = [{transform_indices = @transform_0, window_bounds = array<i64: 4, 32, 250>}, {pipeline_mode = #tpu.pipeline_mode<synchronous>, transform_indices = @transform_1, window_bounds = array<i64: 250, 128>}, {pipeline_mode = #tpu.pipeline_mode<synchronous>, transform_indices = @transform_2, window_bounds = array<i64: 1, 128>}, {transform_indices = @transform_3, window_bounds = array<i64: 32, 128>}]} {
    %c0 = arith.constant 0 : index
    %c0_0 = arith.constant 0 : index
    %c0_1 = arith.constant 0 : index
    %0 = vector.load %arg1[%c0, %c0_0, %c0_1] : memref<4x32x250xbf16, #tpu.memory_space<vmem>>, vector<1x32x250xbf16>
    %1 = vector.shape_cast %0 : vector<1x32x250xbf16> to vector<32x250xbf16>
    %c1 = arith.constant 1 : index
    %c0_2 = arith.constant 0 : index
    %c0_3 = arith.constant 0 : index
    %2 = vector.load %arg1[%c1, %c0_2, %c0_3] : memref<4x32x250xbf16, #tpu.memory_space<vmem>>, vector<1x32x250xbf16>
    %3 = vector.shape_cast %2 : vector<1x32x250xbf16> to vector<32x250xbf16>
    %c2 = arith.constant 2 : index
    %c0_4 = arith.constant 0 : index
    %c0_5 = arith.constant 0 : index
    %4 = vector.load %arg1[%c2, %c0_4, %c0_5] : memref<4x32x250xbf16, #tpu.memory_space<vmem>>, vector<1x32x250xbf16>
    %5 = vector.shape_cast %4 : vector<1x32x250xbf16> to vector<32x250xbf16>
    %c3 = arith.constant 3 : index
    %c0_6 = arith.constant 0 : index
    %c0_7 = arith.constant 0 : index
    %6 = vector.load %arg1[%c3, %c0_6, %c0_7] : memref<4x32x250xbf16, #tpu.memory_space<vmem>>, vector<1x32x250xbf16>
    %7 = vector.shape_cast %6 : vector<1x32x250xbf16> to vector<32x250xbf16>
    %8 = tpu.concatenate %1, %3, %5, %7 in 0 : vector<32x250xbf16>, vector<32x250xbf16>, vector<32x250xbf16>, vector<32x250xbf16> -> vector<128x250xbf16>
    %c0_8 = arith.constant 0 : index
    %c0_9 = arith.constant 0 : index
    %9 = vector.load %arg2[%c0_8, %c0_9] : memref<250x128xbf16, #tpu.memory_space<vmem>>, vector<250x128xbf16>
    %cst = arith.constant dense<0.000000e+00> : vector<128x128xf32>
    %10 = tpu.matmul %8, %9, %cst {dimension_numbers = #tpu.dot_dimension_numbers<[1], [0], [0], [1], [0, 0, 1, 1], [], []>} : vector<128x250xbf16>, vector<250x128xbf16>, vector<128x128xf32> -> vector<128x128xf32>
    %11 = vector.extract_strided_slice %10 {offsets = [0, 0], sizes = [32, 128], strides = [1, 1]} : vector<128x128xf32> to vector<32x128xf32>
    %12 = vector.extract_strided_slice %10 {offsets = [32, 0], sizes = [32, 128], strides = [1, 1]} : vector<128x128xf32> to vector<32x128xf32>
    %13 = arith.maximumf %11, %12 : vector<32x128xf32>
    %14 = vector.extract_strided_slice %10 {offsets = [64, 0], sizes = [32, 128], strides = [1, 1]} : vector<128x128xf32> to vector<32x128xf32>
    %15 = arith.maximumf %13, %14 : vector<32x128xf32>
    %16 = vector.extract_strided_slice %10 {offsets = [96, 0], sizes = [32, 128], strides = [1, 1]} : vector<128x128xf32> to vector<32x128xf32>
    %17 = arith.maximumf %15, %16 : vector<32x128xf32>
    %c0_10 = arith.constant 0 : index
    %c0_11 = arith.constant 0 : index
    %18 = vector.load %arg3[%c0_10, %c0_11] : memref<1x128xf32, #tpu.memory_space<vmem>>, vector<1x128xf32>
    %19 = vector.broadcast %18 : vector<1x128xf32> to vector<32x128xf32>
    %20 = arith.addf %17, %19 : vector<32x128xf32>
    %cst_12 = arith.constant 0.000000e+00 : f32
    %21 = vector.broadcast %cst_12 : f32 to vector<32x128xf32>
    %22 = arith.maximumf %20, %21 : vector<32x128xf32>
    %23 = arith.truncf %22 : vector<32x128xf32> to vector<32x128xbf16>
    %c0_13 = arith.constant 0 : index
    %c0_14 = arith.constant 0 : index
    %24 = vector.load %arg4[%c0_13, %c0_14] : memref<32x128xbf16, #tpu.memory_space<vmem>>, vector<32x128xbf16>
    tpu.vector_store %arg4[%c0_13, %c0_14], %23 {strides = array<i32>} : memref<32x128xbf16, #tpu.memory_space<vmem>>, vector<32x128xbf16>,
    return
  }
  func.func @transform_0(%arg0: i32) -> (i32, i32, i32) {
    %c0_i32 = arith.constant 0 : i32
    %c0_i32_0 = arith.constant 0 : i32
    %c0_i32_1 = arith.constant 0 : i32
    return %c0_i32, %arg0, %c0_i32_0 : i32, i32, i32
  }
  func.func @transform_1(%arg0: i32) -> (i32, i32) {
    %c0_i32 = arith.constant 0 : i32
    %c0_i32_0 = arith.constant 0 : i32
    %c0_i32_1 = arith.constant 0 : i32
    return %c0_i32, %c0_i32_0 : i32, i32
  }
  func.func @transform_2(%arg0: i32) -> (i32, i32) {
    %c0_i32 = arith.constant 0 : i32
    %c0_i32_0 = arith.constant 0 : i32
    %c0_i32_1 = arith.constant 0 : i32
    return %c0_i32, %c0_i32_0 : i32, i32
  }
  func.func @transform_3(%arg0: i32) -> (i32, i32) {
    %c0_i32 = arith.constant 0 : i32
    %c0_i32_0 = arith.constant 0 : i32
    return %arg0, %c0_i32 : i32, i32
  }
}

module attributes {stable_mosaic.version = 11 : i64} {
  func.func @mlp_head_kernel(%arg0: i32, %arg1: memref<8x320xbf16, #tpu.memory_space<vmem>>, %arg2: memref<320x128xbf16, #tpu.memory_space<vmem>>, %arg3: memref<1x128xf32, #tpu.memory_space<vmem>>, %arg4: memref<128x128xbf16, #tpu.memory_space<vmem>>, %arg5: memref<1x128xf32, #tpu.memory_space<vmem>>, %arg6: memref<8x128xf32, #tpu.memory_space<vmem>>) attributes {dimension_semantics = [#tpu.dimension_semantics<parallel>], iteration_bounds = array<i64: 1>, scalar_prefetch = 0 : i64, scratch_operands = 0 : i64, tpu.core_type = #tpu.core_type<tc>, window_params = [{transform_indices = @transform_0, window_bounds = array<i64: 8, 320>}, {pipeline_mode = #tpu.pipeline_mode<synchronous>, transform_indices = @transform_1, window_bounds = array<i64: 320, 128>}, {pipeline_mode = #tpu.pipeline_mode<synchronous>, transform_indices = @transform_2, window_bounds = array<i64: 1, 128>}, {pipeline_mode = #tpu.pipeline_mode<synchronous>, transform_indices = @transform_3, window_bounds = array<i64: 128, 128>}, {pipeline_mode = #tpu.pipeline_mode<synchronous>, transform_indices = @transform_4, window_bounds = array<i64: 1, 128>}, {transform_indices = @transform_5, window_bounds = array<i64: 8, 128>}]} {
    %c0 = arith.constant 0 : index
    %c0_0 = arith.constant 0 : index
    %0 = vector.load %arg1[%c0, %c0_0] : memref<8x320xbf16, #tpu.memory_space<vmem>>, vector<8x320xbf16>
    %c0_1 = arith.constant 0 : index
    %c0_2 = arith.constant 0 : index
    %1 = vector.load %arg2[%c0_1, %c0_2] : memref<320x128xbf16, #tpu.memory_space<vmem>>, vector<320x128xbf16>
    %cst = arith.constant dense<0.000000e+00> : vector<8x128xf32>
    %2 = tpu.matmul %0, %1, %cst {dimension_numbers = #tpu.dot_dimension_numbers<[1], [0], [0], [1], [0, 0, 1, 1], [], []>} : vector<8x320xbf16>, vector<320x128xbf16>, vector<8x128xf32> -> vector<8x128xf32>
    %c0_3 = arith.constant 0 : index
    %c0_4 = arith.constant 0 : index
    %3 = vector.load %arg3[%c0_3, %c0_4] : memref<1x128xf32, #tpu.memory_space<vmem>>, vector<1x128xf32>
    %4 = vector.broadcast %3 : vector<1x128xf32> to vector<8x128xf32>
    %5 = arith.addf %2, %4 : vector<8x128xf32>
    %cst_5 = arith.constant 0.000000e+00 : f32
    %6 = vector.broadcast %cst_5 : f32 to vector<8x128xf32>
    %7 = arith.maximumf %5, %6 : vector<8x128xf32>
    %8 = arith.truncf %7 : vector<8x128xf32> to vector<8x128xbf16>
    %c0_6 = arith.constant 0 : index
    %c0_7 = arith.constant 0 : index
    %9 = vector.load %arg4[%c0_6, %c0_7] : memref<128x128xbf16, #tpu.memory_space<vmem>>, vector<128x128xbf16>
    %cst_8 = arith.constant dense<0.000000e+00> : vector<8x128xf32>
    %10 = tpu.matmul %8, %9, %cst_8 {dimension_numbers = #tpu.dot_dimension_numbers<[1], [0], [0], [1], [0, 0, 1, 1], [], []>} : vector<8x128xbf16>, vector<128x128xbf16>, vector<8x128xf32> -> vector<8x128xf32>
    %c0_9 = arith.constant 0 : index
    %c0_10 = arith.constant 0 : index
    %11 = vector.load %arg5[%c0_9, %c0_10] : memref<1x128xf32, #tpu.memory_space<vmem>>, vector<1x128xf32>
    %12 = vector.broadcast %11 : vector<1x128xf32> to vector<8x128xf32>
    %13 = arith.addf %10, %12 : vector<8x128xf32>
    %14 = tpu.iota {dimensions = array<i32: 1>} : vector<8x128xi32>
    %c10_i32 = arith.constant 10 : i32
    %15 = vector.broadcast %c10_i32 : i32 to vector<8x128xi32>
    %16 = arith.cmpi slt, %14, %15 : vector<8x128xi32>
    %cst_11 = arith.constant -1.000000e+30 : f32
    %17 = vector.broadcast %cst_11 : f32 to vector<8x128xf32>
    %18 = arith.select %16, %13, %17 : vector<8x128xi1>, vector<8x128xf32>
    %cst_12 = arith.constant dense<0xFF800000> : vector<8xf32>
    %19 = vector.multi_reduction <maximumf>, %18, %cst_12 [1] : vector<8x128xf32> to vector<8xf32>
    %20 = vector.shape_cast %19 : vector<8xf32> to vector<8x1xf32>
    %21 = vector.broadcast %20 : vector<8x1xf32> to vector<8x128xf32>
    %22 = arith.subf %18, %21 : vector<8x128xf32>
    %23 = math.exp %22 : vector<8x128xf32>
    %cst_13 = arith.constant 0.000000e+00 : f32
    %24 = vector.broadcast %cst_13 : f32 to vector<8x128xf32>
    %25 = arith.select %16, %23, %24 : vector<8x128xi1>, vector<8x128xf32>
    %cst_14 = arith.constant dense<0.000000e+00> : vector<8xf32>
    %26 = vector.multi_reduction <add>, %25, %cst_14 [1] : vector<8x128xf32> to vector<8xf32>
    %27 = vector.shape_cast %26 : vector<8xf32> to vector<8x1xf32>
    %28 = math.log %27 : vector<8x1xf32>
    %29 = vector.broadcast %28 : vector<8x1xf32> to vector<8x128xf32>
    %30 = arith.subf %22, %29 : vector<8x128xf32>
    %cst_15 = arith.constant 0.000000e+00 : f32
    %31 = vector.broadcast %cst_15 : f32 to vector<8x128xf32>
    %32 = arith.select %16, %30, %31 : vector<8x128xi1>, vector<8x128xf32>
    %c0_16 = arith.constant 0 : index
    %c0_17 = arith.constant 0 : index
    %33 = vector.load %arg6[%c0_16, %c0_17] : memref<8x128xf32, #tpu.memory_space<vmem>>, vector<8x128xf32>
    tpu.vector_store %arg6[%c0_16, %c0_17], %32 {strides = array<i32>} : memref<8x128xf32, #tpu.memory_space<vmem>>, vector<8x128xf32>,
    return
  }
  func.func @transform_0(%arg0: i32) -> (i32, i32) {
    %c0_i32 = arith.constant 0 : i32
    %c0_i32_0 = arith.constant 0 : i32
    return %arg0, %c0_i32 : i32, i32
  }
  func.func @transform_1(%arg0: i32) -> (i32, i32) {
    %c0_i32 = arith.constant 0 : i32
    %c0_i32_0 = arith.constant 0 : i32
    %c0_i32_1 = arith.constant 0 : i32
    return %c0_i32, %c0_i32_0 : i32, i32
  }
  func.func @transform_2(%arg0: i32) -> (i32, i32) {
    %c0_i32 = arith.constant 0 : i32
    %c0_i32_0 = arith.constant 0 : i32
    %c0_i32_1 = arith.constant 0 : i32
    return %c0_i32, %c0_i32_0 : i32, i32
  }
  func.func @transform_3(%arg0: i32) -> (i32, i32) {
    %c0_i32 = arith.constant 0 : i32
    %c0_i32_0 = arith.constant 0 : i32
    %c0_i32_1 = arith.constant 0 : i32
    return %c0_i32, %c0_i32_0 : i32, i32
  }
  func.func @transform_4(%arg0: i32) -> (i32, i32) {
    %c0_i32 = arith.constant 0 : i32
    %c0_i32_0 = arith.constant 0 : i32
    %c0_i32_1 = arith.constant 0 : i32
    return %c0_i32, %c0_i32_0 : i32, i32
  }
  func.func @transform_5(%arg0: i32) -> (i32, i32) {
    %c0_i32 = arith.constant 0 : i32
    %c0_i32_0 = arith.constant 0 : i32
    return %arg0, %c0_i32 : i32, i32
  }
}

</mosaic_0001>

<llo_original>
// kernel: cnn_mnist_forward.3
$region0: #{cnn_mnist_forward.3}
  #allocation0 [shape = 'u32[]', space=smem, size = 0x4, offset = 0x4, fixed_abs, tag = 'smem constant byte address 0x4 - core index']
  #allocation1 [shape = 'u32[72,128]{1,0:T(1,128)}', space=vmem, size = 0x9000, scoped, tag = 'internal scratch']
  %s0 = inlined_call_operand.vmem [shape: bf16[4,288,25], index: 0, kind: input, shape index: {}]
  %s1 = inlined_call_operand.vmem [shape: bf16[25,128], index: 1, kind: input, shape index: {}]
  %s2 = inlined_call_operand.vmem [shape: f32[1,128], index: 2, kind: input, shape index: {}]
  %s3 = inlined_call_operand.vmem [shape: bf16[288,128], index: 3, kind: output, shape index: {}]
  %s4 = sld [smem:[#allocation0]]
  $region22: #{cnn_mnist_forward.3} parent=0
    _
  %s6 = ssub.s32 1, %s4
  %s7 = scalar_select 0, %s6, %s4
  // Predicated region
  $region2: #{cnn_mnist_forward.3} parent=0 // pred_check
    _
  $region3: #{cnn_mnist_forward.3} parent=0 // pred_check_branch
    %9 = sbr.rel (0) target = $region5
  $region4: #{cnn_mnist_forward.3} parent=0 // pred_region
    _
  $region5: #{cnn_mnist_forward.3} parent=0 // pred_fallthru
    _
  // Predicated region
  $region6: #{cnn_mnist_forward.3} parent=0 // pred_check
    _
  $region7: #{cnn_mnist_forward.3} parent=0 // pred_check_branch
    %11 = sbr.rel (0) target = $region9
  $region8: #{cnn_mnist_forward.3} parent=0 // pred_region
    _
  $region9: #{cnn_mnist_forward.3} parent=0 // pred_fallthru
    _
  // Predicated region
  $region10: #{cnn_mnist_forward.3} parent=0 // pred_check
    _
  $region11: #{cnn_mnist_forward.3} parent=0 // pred_check_branch
    %13 = sbr.rel (0) target = $region13
  $region12: #{cnn_mnist_forward.3} parent=0 // pred_region
    _
  $region13: #{cnn_mnist_forward.3} parent=0 // pred_fallthru
    _
  %v15 = vld [vmem:[%s0] sm:$0xf]
  %v16 = vld [vmem:[%s0 + $0x4] sm:$0xf]
  %v17 = vld [vmem:[%s0 + $0x8] sm:$0xf]
  %v18 = vld [vmem:[%s0 + $0xc] sm:$0xf]
  %v19 = vld [vmem:[%s0 + $0x10] sm:$0xf]
  %v20 = vld [vmem:[%s0 + $0x14] sm:$0xf]
  %v21 = vld [vmem:[%s0 + $0x18] sm:$0xf]
  %v22 = vld [vmem:[%s0 + $0x1c] sm:$0xf]
  %v23 = vld [vmem:[%s0 + $0x20] sm:$0xf]
  %v24 = vld [vmem:[%s0 + $0x24] sm:$0xf]
  %v25 = vld [vmem:[%s0 + $0x28] sm:$0xf]
  %v26 = vld [vmem:[%s0 + $0x2c] sm:$0xf]
  %v27 = vld [vmem:[%s0 + $0x30] sm:$0xf]
  %v28 = vld [vmem:[%s0 + $0x34] sm:$0xf]
  %v29 = vld [vmem:[%s0 + $0x38] sm:$0xf]
  %v30 = vld [vmem:[%s0 + $0x3c] sm:$0xf]
  %v31 = vld [vmem:[%s0 + $0x40] sm:$0xf]
  %v32 = vld [vmem:[%s0 + $0x44] sm:$0xf]
  %v33 = vld [vmem:[%s0 + $0x48] sm:$0xf]
  %v34 = vld [vmem:[%s0 + $0x4c] sm:$0xf]
  %v35 = vld [vmem:[%s0 + $0x50] sm:$0xf]
  %v36 = vld [vmem:[%s0 + $0x54] sm:$0xf]
  %v37 = vld [vmem:[%s0 + $0x58] sm:$0xf]
  %v38 = vld [vmem:[%s0 + $0x5c] sm:$0xf]
  %v39 = vld [vmem:[%s0 + $0x60] sm:$0xf]
  %v40 = vld [vmem:[%s0 + $0x64] sm:$0xf]
  %v41 = vld [vmem:[%s0 + $0x68] sm:$0xf]
  %v42 = vld [vmem:[%s0 + $0x6c] sm:$0xf]
  %v43 = vld [vmem:[%s0 + $0x70] sm:$0xf]
  %v44 = vld [vmem:[%s0 + $0x74] sm:$0xf]
  %v45 = vld [vmem:[%s0 + $0x78] sm:$0xf]
  %v46 = vld [vmem:[%s0 + $0x7c] sm:$0xf]
  %v47 = vld [vmem:[%s0 + $0x80] sm:$0xf]
  %v48 = vld [vmem:[%s0 + $0x84] sm:$0xf]
  %v49 = vld [vmem:[%s0 + $0x88] sm:$0xf]
  %v50 = vld [vmem:[%s0 + $0x8c] sm:$0xf]
  %s51 = scalar_lea.vmem %s0, 144
  %v52 = vld [vmem:[%s51] sm:$0xf]
  %v53 = vld [vmem:[%s51 + $0x4] sm:$0xf]
  %v54 = vld [vmem:[%s51 + $0x8] sm:$0xf]
  %v55 = vld [vmem:[%s51 + $0xc] sm:$0xf]
  %v56 = vld [vmem:[%s51 + $0x10] sm:$0xf]
  %v57 = vld [vmem:[%s51 + $0x14] sm:$0xf]
  %v58 = vld [vmem:[%s51 + $0x18] sm:$0xf]
  %v59 = vld [vmem:[%s51 + $0x1c] sm:$0xf]
  %v60 = vld [vmem:[%s51 + $0x20] sm:$0xf]
  %v61 = vld [vmem:[%s51 + $0x24] sm:$0xf]
  %v62 = vld [vmem:[%s51 + $0x28] sm:$0xf]
  %v63 = vld [vmem:[%s51 + $0x2c] sm:$0xf]
  %v64 = vld [vmem:[%s51 + $0x30] sm:$0xf]
  %v65 = vld [vmem:[%s51 + $0x34] sm:$0xf]
  %v66 = vld [vmem:[%s51 + $0x38] sm:$0xf]
  %v67 = vld [vmem:[%s51 + $0x3c] sm:$0xf]
  %v68 = vld [vmem:[%s51 + $0x40] sm:$0xf]
  %v69 = vld [vmem:[%s51 + $0x44] sm:$0xf]
  %v70 = vld [vmem:[%s51 + $0x48] sm:$0xf]
  %v71 = vld [vmem:[%s51 + $0x4c] sm:$0xf]
  %v72 = vld [vmem:[%s51 + $0x50] sm:$0xf]
  %v73 = vld [vmem:[%s51 + $0x54] sm:$0xf]
  %v74 = vld [vmem:[%s51 + $0x58] sm:$0xf]
  %v75 = vld [vmem:[%s51 + $0x5c] sm:$0xf]
  %v76 = vld [vmem:[%s51 + $0x60] sm:$0xf]
  %v77 = vld [vmem:[%s51 + $0x64] sm:$0xf]
  %v78 = vld [vmem:[%s51 + $0x68] sm:$0xf]
  %v79 = vld [vmem:[%s51 + $0x6c] sm:$0xf]
  %v80 = vld [vmem:[%s51 + $0x70] sm:$0xf]
  %v81 = vld [vmem:[%s51 + $0x74] sm:$0xf]
  %v82 = vld [vmem:[%s51 + $0x78] sm:$0xf]
  %v83 = vld [vmem:[%s51 + $0x7c] sm:$0xf]
  %v84 = vld [vmem:[%s51 + $0x80] sm:$0xf]
  %v85 = vld [vmem:[%s51 + $0x84] sm:$0xf]
  %v86 = vld [vmem:[%s51 + $0x88] sm:$0xf]
  %v87 = vld [vmem:[%s51 + $0x8c] sm:$0xf]
  %s88 = scalar_lea.vmem %s0, 288
  %v89 = vld [vmem:[%s88] sm:$0xf]
  %v90 = vld [vmem:[%s88 + $0x4] sm:$0xf]
  %v91 = vld [vmem:[%s88 + $0x8] sm:$0xf]
  %v92 = vld [vmem:[%s88 + $0xc] sm:$0xf]
  %v93 = vld [vmem:[%s88 + $0x10] sm:$0xf]
  %v94 = vld [vmem:[%s88 + $0x14] sm:$0xf]
  %v95 = vld [vmem:[%s88 + $0x18] sm:$0xf]
  %v96 = vld [vmem:[%s88 + $0x1c] sm:$0xf]
  %v97 = vld [vmem:[%s88 + $0x20] sm:$0xf]
  %v98 = vld [vmem:[%s88 + $0x24] sm:$0xf]
  %v99 = vld [vmem:[%s88 + $0x28] sm:$0xf]
  %v100 = vld [vmem:[%s88 + $0x2c] sm:$0xf]
  %v101 = vld [vmem:[%s88 + $0x30] sm:$0xf]
  %v102 = vld [vmem:[%s88 + $0x34] sm:$0xf]
  %v103 = vld [vmem:[%s88 + $0x38] sm:$0xf]
  %v104 = vld [vmem:[%s88 + $0x3c] sm:$0xf]
  %v105 = vld [vmem:[%s88 + $0x40] sm:$0xf]
  %v106 = vld [vmem:[%s88 + $0x44] sm:$0xf]
  %v107 = vld [vmem:[%s88 + $0x48] sm:$0xf]
  %v108 = vld [vmem:[%s88 + $0x4c] sm:$0xf]
  %v109 = vld [vmem:[%s88 + $0x50] sm:$0xf]
  %v110 = vld [vmem:[%s88 + $0x54] sm:$0xf]
  %v111 = vld [vmem:[%s88 + $0x58] sm:$0xf]
  %v112 = vld [vmem:[%s88 + $0x5c] sm:$0xf]
  %v113 = vld [vmem:[%s88 + $0x60] sm:$0xf]
  %v114 = vld [vmem:[%s88 + $0x64] sm:$0xf]
  %v115 = vld [vmem:[%s88 + $0x68] sm:$0xf]
  %v116 = vld [vmem:[%s88 + $0x6c] sm:$0xf]
  %v117 = vld [vmem:[%s88 + $0x70] sm:$0xf]
  %v118 = vld [vmem:[%s88 + $0x74] sm:$0xf]
  %v119 = vld [vmem:[%s88 + $0x78] sm:$0xf]
  %v120 = vld [vmem:[%s88 + $0x7c] sm:$0xf]
  %v121 = vld [vmem:[%s88 + $0x80] sm:$0xf]
  %v122 = vld [vmem:[%s88 + $0x84] sm:$0xf]
  %v123 = vld [vmem:[%s88 + $0x88] sm:$0xf]
  %v124 = vld [vmem:[%s88 + $0x8c] sm:$0xf]
  %s125 = scalar_lea.vmem %s0, 432
  %v126 = vld [vmem:[%s125] sm:$0xf]
  %v127 = vld [vmem:[%s125 + $0x4] sm:$0xf]
  %v128 = vld [vmem:[%s125 + $0x8] sm:$0xf]
  %v129 = vld [vmem:[%s125 + $0xc] sm:$0xf]
  %v130 = vld [vmem:[%s125 + $0x10] sm:$0xf]
  %v131 = vld [vmem:[%s125 + $0x14] sm:$0xf]
  %v132 = vld [vmem:[%s125 + $0x18] sm:$0xf]
  %v133 = vld [vmem:[%s125 + $0x1c] sm:$0xf]
  %v134 = vld [vmem:[%s125 + $0x20] sm:$0xf]
  %v135 = vld [vmem:[%s125 + $0x24] sm:$0xf]
  %v136 = vld [vmem:[%s125 + $0x28] sm:$0xf]
  %v137 = vld [vmem:[%s125 + $0x2c] sm:$0xf]
  %v138 = vld [vmem:[%s125 + $0x30] sm:$0xf]
  %v139 = vld [vmem:[%s125 + $0x34] sm:$0xf]
  %v140 = vld [vmem:[%s125 + $0x38] sm:$0xf]
  %v141 = vld [vmem:[%s125 + $0x3c] sm:$0xf]
  %v142 = vld [vmem:[%s125 + $0x40] sm:$0xf]
  %v143 = vld [vmem:[%s125 + $0x44] sm:$0xf]
  %v144 = vld [vmem:[%s125 + $0x48] sm:$0xf]
  %v145 = vld [vmem:[%s125 + $0x4c] sm:$0xf]
  %v146 = vld [vmem:[%s125 + $0x50] sm:$0xf]
  %v147 = vld [vmem:[%s125 + $0x54] sm:$0xf]
  %v148 = vld [vmem:[%s125 + $0x58] sm:$0xf]
  %v149 = vld [vmem:[%s125 + $0x5c] sm:$0xf]
  %v150 = vld [vmem:[%s125 + $0x60] sm:$0xf]
  %v151 = vld [vmem:[%s125 + $0x64] sm:$0xf]
  %v152 = vld [vmem:[%s125 + $0x68] sm:$0xf]
  %v153 = vld [vmem:[%s125 + $0x6c] sm:$0xf]
  %v154 = vld [vmem:[%s125 + $0x70] sm:$0xf]
  %v155 = vld [vmem:[%s125 + $0x74] sm:$0xf]
  %v156 = vld [vmem:[%s125 + $0x78] sm:$0xf]
  %v157 = vld [vmem:[%s125 + $0x7c] sm:$0xf]
  %v158 = vld [vmem:[%s125 + $0x80] sm:$0xf]
  %v159 = vld [vmem:[%s125 + $0x84] sm:$0xf]
  %v160 = vld [vmem:[%s125 + $0x88] sm:$0xf]
  %v161 = vld [vmem:[%s125 + $0x8c] sm:$0xf]
  %v198 = vunpack.c.l.b16 %v15
  %v199 = vunpack.c.l.b16 %v16
  %v200 = vunpack.c.l.b16 %v17
  %v201 = vunpack.c.l.b16 %v18
  %v202 = vunpack.c.l.b16 %v19
  %v203 = vunpack.c.l.b16 %v20
  %v204 = vunpack.c.l.b16 %v21
  %v205 = vunpack.c.l.b16 %v22
  %v206 = vunpack.c.l.b16 %v23
  %v207 = vunpack.c.l.b16 %v24
  %v208 = vunpack.c.l.b16 %v25
  %v209 = vunpack.c.l.b16 %v26
  %v210 = vunpack.c.l.b16 %v27
  %v211 = vunpack.c.l.b16 %v28
  %v212 = vunpack.c.l.b16 %v29
  %v213 = vunpack.c.l.b16 %v30
  %v214 = vunpack.c.l.b16 %v31
  %v215 = vunpack.c.l.b16 %v32
  %v216 = vunpack.c.l.b16 %v33
  %v217 = vunpack.c.l.b16 %v34
  %v218 = vunpack.c.l.b16 %v35
  %v219 = vunpack.c.l.b16 %v36
  %v220 = vunpack.c.l.b16 %v37
  %v221 = vunpack.c.l.b16 %v38
  %v222 = vunpack.c.l.b16 %v39
  %v223 = vunpack.c.l.b16 %v40
  %v224 = vunpack.c.l.b16 %v41
  %v225 = vunpack.c.l.b16 %v42
  %v226 = vunpack.c.l.b16 %v43
  %v227 = vunpack.c.l.b16 %v44
  %v228 = vunpack.c.l.b16 %v45
  %v229 = vunpack.c.l.b16 %v46
  %v230 = vunpack.c.l.b16 %v47
  %v231 = vunpack.c.l.b16 %v48
  %v232 = vunpack.c.l.b16 %v49
  %v233 = vunpack.c.l.b16 %v50
  %v234 = vpack.c.b16 %v199, %v198
  %v235 = vpack.c.b16 %v201, %v200
  %v236 = vpack.c.b16 %v203, %v202
  %v237 = vpack.c.b16 %v205, %v204
  %v238 = vpack.c.b16 %v207, %v206
  %v239 = vpack.c.b16 %v209, %v208
  %v240 = vpack.c.b16 %v211, %v210
  %v241 = vpack.c.b16 %v213, %v212
  %v242 = vpack.c.b16 %v215, %v214
  %v243 = vpack.c.b16 %v217, %v216
  %v244 = vpack.c.b16 %v219, %v218
  %v245 = vpack.c.b16 %v221, %v220
  %v246 = vpack.c.b16 %v223, %v222
  %v247 = vpack.c.b16 %v225, %v224
  %v248 = vpack.c.b16 %v227, %v226
  %v249 = vpack.c.b16 %v229, %v228
  %v250 = vpack.c.b16 %v231, %v230
  %v251 = vpack.c.b16 %v233, %v232
  %v288 = vunpack.c.l.b16 %v52
  %v289 = vunpack.c.l.b16 %v53
  %v290 = vunpack.c.l.b16 %v54
  %v291 = vunpack.c.l.b16 %v55
  %v292 = vunpack.c.l.b16 %v56
  %v293 = vunpack.c.l.b16 %v57
  %v294 = vunpack.c.l.b16 %v58
  %v295 = vunpack.c.l.b16 %v59
  %v296 = vunpack.c.l.b16 %v60
  %v297 = vunpack.c.l.b16 %v61
  %v298 = vunpack.c.l.b16 %v62
  %v299 = vunpack.c.l.b16 %v63
  %v300 = vunpack.c.l.b16 %v64
  %v301 = vunpack.c.l.b16 %v65
  %v302 = vunpack.c.l.b16 %v66
  %v303 = vunpack.c.l.b16 %v67
  %v304 = vunpack.c.l.b16 %v68
  %v305 = vunpack.c.l.b16 %v69
  %v306 = vunpack.c.l.b16 %v70
  %v307 = vunpack.c.l.b16 %v71
  %v308 = vunpack.c.l.b16 %v72
  %v309 = vunpack.c.l.b16 %v73
  %v310 = vunpack.c.l.b16 %v74
  %v311 = vunpack.c.l.b16 %v75
  %v312 = vunpack.c.l.b16 %v76
  %v313 = vunpack.c.l.b16 %v77
  %v314 = vunpack.c.l.b16 %v78
  %v315 = vunpack.c.l.b16 %v79
  %v316 = vunpack.c.l.b16 %v80
  %v317 = vunpack.c.l.b16 %v81
  %v318 = vunpack.c.l.b16 %v82
  %v319 = vunpack.c.l.b16 %v83
  %v320 = vunpack.c.l.b16 %v84
  %v321 = vunpack.c.l.b16 %v85
  %v322 = vunpack.c.l.b16 %v86
  %v323 = vunpack.c.l.b16 %v87
  %v324 = vpack.c.b16 %v289, %v288
  %v325 = vpack.c.b16 %v291, %v290
  %v326 = vpack.c.b16 %v293, %v292
  %v327 = vpack.c.b16 %v295, %v294
  %v328 = vpack.c.b16 %v297, %v296
  %v329 = vpack.c.b16 %v299, %v298
  %v330 = vpack.c.b16 %v301, %v300
  %v331 = vpack.c.b16 %v303, %v302
  %v332 = vpack.c.b16 %v305, %v304
  %v333 = vpack.c.b16 %v307, %v306
  %v334 = vpack.c.b16 %v309, %v308
  %v335 = vpack.c.b16 %v311, %v310
  %v336 = vpack.c.b16 %v313, %v312
  %v337 = vpack.c.b16 %v315, %v314
  %v338 = vpack.c.b16 %v317, %v316
  %v339 = vpack.c.b16 %v319, %v318
  %v340 = vpack.c.b16 %v321, %v320
  %v341 = vpack.c.b16 %v323, %v322
  %v378 = vunpack.c.l.b16 %v89
  %v379 = vunpack.c.l.b16 %v90
  %v380 = vunpack.c.l.b16 %v91
  %v381 = vunpack.c.l.b16 %v92
  %v382 = vunpack.c.l.b16 %v93
  %v383 = vunpack.c.l.b16 %v94
  %v384 = vunpack.c.l.b16 %v95
  %v385 = vunpack.c.l.b16 %v96
  %v386 = vunpack.c.l.b16 %v97
  %v387 = vunpack.c.l.b16 %v98
  %v388 = vunpack.c.l.b16 %v99
  %v389 = vunpack.c.l.b16 %v100
  %v390 = vunpack.c.l.b16 %v101
  %v391 = vunpack.c.l.b16 %v102
  %v392 = vunpack.c.l.b16 %v103
  %v393 = vunpack.c.l.b16 %v104
  %v394 = vunpack.c.l.b16 %v105
  %v395 = vunpack.c.l.b16 %v106
  %v396 = vunpack.c.l.b16 %v107
  %v397 = vunpack.c.l.b16 %v108
  %v398 = vunpack.c.l.b16 %v109
  %v399 = vunpack.c.l.b16 %v110
  %v400 = vunpack.c.l.b16 %v111
  %v401 = vunpack.c.l.b16 %v112
  %v402 = vunpack.c.l.b16 %v113
  %v403 = vunpack.c.l.b16 %v114
  %v404 = vunpack.c.l.b16 %v115
  %v405 = vunpack.c.l.b16 %v116
  %v406 = vunpack.c.l.b16 %v117
  %v407 = vunpack.c.l.b16 %v118
  %v408 = vunpack.c.l.b16 %v119
  %v409 = vunpack.c.l.b16 %v120
  %v410 = vunpack.c.l.b16 %v121
  %v411 = vunpack.c.l.b16 %v122
  %v412 = vunpack.c.l.b16 %v123
  %v413 = vunpack.c.l.b16 %v124
  %v414 = vpack.c.b16 %v379, %v378
  %v415 = vpack.c.b16 %v381, %v380
  %v416 = vpack.c.b16 %v383, %v382
  %v417 = vpack.c.b16 %v385, %v384
  %v418 = vpack.c.b16 %v387, %v386
  %v419 = vpack.c.b16 %v389, %v388
  %v420 = vpack.c.b16 %v391, %v390
  %v421 = vpack.c.b16 %v393, %v392
  %v422 = vpack.c.b16 %v395, %v394
  %v423 = vpack.c.b16 %v397, %v396
  %v424 = vpack.c.b16 %v399, %v398
  %v425 = vpack.c.b16 %v401, %v400
  %v426 = vpack.c.b16 %v403, %v402
  %v427 = vpack.c.b16 %v405, %v404
  %v428 = vpack.c.b16 %v407, %v406
  %v429 = vpack.c.b16 %v409, %v408
  %v430 = vpack.c.b16 %v411, %v410
  %v431 = vpack.c.b16 %v413, %v412
  %v468 = vunpack.c.l.b16 %v126
  %v469 = vunpack.c.l.b16 %v127
  %v470 = vunpack.c.l.b16 %v128
  %v471 = vunpack.c.l.b16 %v129
  %v472 = vunpack.c.l.b16 %v130
  %v473 = vunpack.c.l.b16 %v131
  %v474 = vunpack.c.l.b16 %v132
  %v475 = vunpack.c.l.b16 %v133
  %v476 = vunpack.c.l.b16 %v134
  %v477 = vunpack.c.l.b16 %v135
  %v478 = vunpack.c.l.b16 %v136
  %v479 = vunpack.c.l.b16 %v137
  %v480 = vunpack.c.l.b16 %v138
  %v481 = vunpack.c.l.b16 %v139
  %v482 = vunpack.c.l.b16 %v140
  %v483 = vunpack.c.l.b16 %v141
  %v484 = vunpack.c.l.b16 %v142
  %v485 = vunpack.c.l.b16 %v143
  %v486 = vunpack.c.l.b16 %v144
  %v487 = vunpack.c.l.b16 %v145
  %v488 = vunpack.c.l.b16 %v146
  %v489 = vunpack.c.l.b16 %v147
  %v490 = vunpack.c.l.b16 %v148
  %v491 = vunpack.c.l.b16 %v149
  %v492 = vunpack.c.l.b16 %v150
  %v493 = vunpack.c.l.b16 %v151
  %v494 = vunpack.c.l.b16 %v152
  %v495 = vunpack.c.l.b16 %v153
  %v496 = vunpack.c.l.b16 %v154
  %v497 = vunpack.c.l.b16 %v155
  %v498 = vunpack.c.l.b16 %v156
  %v499 = vunpack.c.l.b16 %v157
  %v500 = vunpack.c.l.b16 %v158
  %v501 = vunpack.c.l.b16 %v159
  %v502 = vunpack.c.l.b16 %v160
  %v503 = vunpack.c.l.b16 %v161
  %v504 = vpack.c.b16 %v469, %v468
  %v505 = vpack.c.b16 %v471, %v470
  %v506 = vpack.c.b16 %v473, %v472
  %v507 = vpack.c.b16 %v475, %v474
  %v508 = vpack.c.b16 %v477, %v476
  %v509 = vpack.c.b16 %v479, %v478
  %v510 = vpack.c.b16 %v481, %v480
  %v511 = vpack.c.b16 %v483, %v482
  %v512 = vpack.c.b16 %v485, %v484
  %v513 = vpack.c.b16 %v487, %v486
  %v514 = vpack.c.b16 %v489, %v488
  %v515 = vpack.c.b16 %v491, %v490
  %v516 = vpack.c.b16 %v493, %v492
  %v517 = vpack.c.b16 %v495, %v494
  %v518 = vpack.c.b16 %v497, %v496
  %v519 = vpack.c.b16 %v499, %v498
  %v520 = vpack.c.b16 %v501, %v500
  %v521 = vpack.c.b16 %v503, %v502
  %v522 = vld [vmem:[%s1] sm:$0xf]
  %v523 = vld [vmem:[%s1 + $0x4] sm:$0xf]
  %v524 = vld [vmem:[%s1 + $0x8] sm:$0xf]
  %v525 = vld [vmem:[%s1 + $0xc] sm:$0x1]
  %v530 = vunpack.c.l.b16 %v522
  %v531 = vunpack.c.l.b16 %v523
  %v532 = vunpack.c.l.b16 %v524
  %v533 = vunpack.c.l.b16 %v525
  %v534 = vpack.c.b16 %v531, %v530
  %v535 = vpack.c.b16 %v533, %v532
  %vm537 = vcmask 203776
  %v539 = vsel %vm537, %v234, 0
  %v542 = vsel %vm537, %v235, 0
  %v545 = vsel %vm537, %v236, 0
  %v548 = vsel %vm537, %v237, 0
  %v551 = vsel %vm537, %v238, 0
  %v554 = vsel %vm537, %v239, 0
  %v557 = vsel %vm537, %v240, 0
  %v560 = vsel %vm537, %v241, 0
  %v563 = vsel %vm537, %v242, 0
  %v566 = vsel %vm537, %v243, 0
  %v569 = vsel %vm537, %v244, 0
  %v572 = vsel %vm537, %v245, 0
  %v575 = vsel %vm537, %v246, 0
  %v578 = vsel %vm537, %v247, 0
  %v581 = vsel %vm537, %v248, 0
  %v584 = vsel %vm537, %v249, 0
  %v587 = vsel %vm537, %v250, 0
  %v590 = vsel %vm537, %v251, 0
  %v593 = vsel %vm537, %v324, 0
  %v596 = vsel %vm537, %v325, 0
  %v599 = vsel %vm537, %v326, 0
  %v602 = vsel %vm537, %v327, 0
  %v605 = vsel %vm537, %v328, 0
  %v608 = vsel %vm537, %v329, 0
  %v611 = vsel %vm537, %v330, 0
  %v614 = vsel %vm537, %v331, 0
  %v617 = vsel %vm537, %v332, 0
  %v620 = vsel %vm537, %v333, 0
  %v623 = vsel %vm537, %v334, 0
  %v626 = vsel %vm537, %v335, 0
  %v629 = vsel %vm537, %v336, 0
  %v632 = vsel %vm537, %v337, 0
  %v635 = vsel %vm537, %v338, 0
  %v638 = vsel %vm537, %v339, 0
  %v641 = vsel %vm537, %v340, 0
  %v644 = vsel %vm537, %v341, 0
  %v647 = vsel %vm537, %v414, 0
  %v650 = vsel %vm537, %v415, 0
  %v653 = vsel %vm537, %v416, 0
  %v656 = vsel %vm537, %v417, 0
  %v659 = vsel %vm537, %v418, 0
  %v662 = vsel %vm537, %v419, 0
  %v665 = vsel %vm537, %v420, 0
  %v668 = vsel %vm537, %v421, 0
  %v671 = vsel %vm537, %v422, 0
  %v674 = vsel %vm537, %v423, 0
  %v677 = vsel %vm537, %v424, 0
  %v680 = vsel %vm537, %v425, 0
  %v683 = vsel %vm537, %v426, 0
  %v686 = vsel %vm537, %v427, 0
  %v689 = vsel %vm537, %v428, 0
  %v692 = vsel %vm537, %v429, 0
  %v695 = vsel %vm537, %v430, 0
  %v698 = vsel %vm537, %v431, 0
  %v701 = vsel %vm537, %v504, 0
  %v704 = vsel %vm537, %v505, 0
  %v707 = vsel %vm537, %v506, 0
  %v710 = vsel %vm537, %v507, 0
  %v713 = vsel %vm537, %v508, 0
  %v716 = vsel %vm537, %v509, 0
  %v719 = vsel %vm537, %v510, 0
  %v722 = vsel %vm537, %v511, 0
  %v725 = vsel %vm537, %v512, 0
  %v728 = vsel %vm537, %v513, 0
  %v731 = vsel %vm537, %v514, 0
  %v734 = vsel %vm537, %v515, 0
  %v737 = vsel %vm537, %v516, 0
  %v740 = vsel %vm537, %v517, 0
  %v743 = vsel %vm537, %v518, 0
  %v746 = vsel %vm537, %v519, 0
  %v749 = vsel %vm537, %v520, 0
  %v752 = vsel %vm537, %v521, 0
  %vm754 = vcmask 1043456
  %vm755 = vcmask 1044480
  %v756 = vsel %vm754, 4294967295, 65535
  %v757 = vsel %vm755, %v756, 0
  %v759 = vand.u32 %v535, %v757
  %761 = vmatpush.bf16.msra.mxu0 0
  %762 = vmatpush.bf16.msra.mxu0 0
  %763 = vmatpush.bf16.msra.mxu0 0
  %764 = vmatpush.bf16.msra.mxu0 0
  %765 = vmatpush.bf16.msra.mxu0 0
  %766 = vmatpush.bf16.msra.mxu0 0
  %767 = vmatpush.bf16.msra.mxu0 %v759
  %768 = vmatpush.bf16.msra.mxu0 %v534
  %769 = vmatmul.bf16.gmra.mxu0 %v539
  %v770 = vpop.f32.mrf.mxu0
  %v771 = vadd.f32 0.0, %v770
  %v772 = vpop.f32.mrf.mxu0
  %v773 = vadd.f32 0.0, %v772
  %774 = vmatmul.bf16.gmra.mxu0 %v542
  %v775 = vpop.f32.mrf.mxu0
  %v776 = vadd.f32 0.0, %v775
  %v777 = vpop.f32.mrf.mxu0
  %v778 = vadd.f32 0.0, %v777
  %779 = vmatmul.bf16.gmra.mxu0 %v545
  %v780 = vpop.f32.mrf.mxu0
  %v781 = vadd.f32 0.0, %v780
  %v782 = vpop.f32.mrf.mxu0
  %v783 = vadd.f32 0.0, %v782
  %784 = vmatmul.bf16.gmra.mxu0 %v548
  %v785 = vpop.f32.mrf.mxu0
  %v786 = vadd.f32 0.0, %v785
  %v787 = vpop.f32.mrf.mxu0
  %v788 = vadd.f32 0.0, %v787
  %789 = vmatmul.bf16.gmra.mxu0 %v551
  %v790 = vpop.f32.mrf.mxu0
  %v791 = vadd.f32 0.0, %v790
  %v792 = vpop.f32.mrf.mxu0
  %v793 = vadd.f32 0.0, %v792
  %794 = vmatmul.bf16.gmra.mxu0 %v554
  %v795 = vpop.f32.mrf.mxu0
  %v796 = vadd.f32 0.0, %v795
  %v797 = vpop.f32.mrf.mxu0
  %v798 = vadd.f32 0.0, %v797
  %799 = vmatmul.bf16.gmra.mxu0 %v557
  %v800 = vpop.f32.mrf.mxu0
  %v801 = vadd.f32 0.0, %v800
  %v802 = vpop.f32.mrf.mxu0
  %v803 = vadd.f32 0.0, %v802
  %804 = vmatmul.bf16.gmra.mxu0 %v560
  %v805 = vpop.f32.mrf.mxu0
  %v806 = vadd.f32 0.0, %v805
  %v807 = vpop.f32.mrf.mxu0
  %v808 = vadd.f32 0.0, %v807
  %809 = vmatmul.bf16.gmra.mxu0 %v563
  %v810 = vpop.f32.mrf.mxu0
  %v811 = vadd.f32 0.0, %v810
  %v812 = vpop.f32.mrf.mxu0
  %v813 = vadd.f32 0.0, %v812
  %814 = vmatmul.bf16.gmra.mxu0 %v566
  %v815 = vpop.f32.mrf.mxu0
  %v816 = vadd.f32 0.0, %v815
  %v817 = vpop.f32.mrf.mxu0
  %v818 = vadd.f32 0.0, %v817
  %819 = vmatmul.bf16.gmra.mxu0 %v569
  %v820 = vpop.f32.mrf.mxu0
  %v821 = vadd.f32 0.0, %v820
  %v822 = vpop.f32.mrf.mxu0
  %v823 = vadd.f32 0.0, %v822
  %824 = vmatmul.bf16.gmra.mxu0 %v572
  %v825 = vpop.f32.mrf.mxu0
  %v826 = vadd.f32 0.0, %v825
  %v827 = vpop.f32.mrf.mxu0
  %v828 = vadd.f32 0.0, %v827
  %829 = vmatmul.bf16.gmra.mxu0 %v575
  %v830 = vpop.f32.mrf.mxu0
  %v831 = vadd.f32 0.0, %v830
  %v832 = vpop.f32.mrf.mxu0
  %v833 = vadd.f32 0.0, %v832
  %834 = vmatmul.bf16.gmra.mxu0 %v578
  %v835 = vpop.f32.mrf.mxu0
  %v836 = vadd.f32 0.0, %v835
  %v837 = vpop.f32.mrf.mxu0
  %v838 = vadd.f32 0.0, %v837
  %839 = vmatmul.bf16.gmra.mxu0 %v581
  %v840 = vpop.f32.mrf.mxu0
  %v841 = vadd.f32 0.0, %v840
  %v842 = vpop.f32.mrf.mxu0
  %v843 = vadd.f32 0.0, %v842
  %844 = vmatmul.bf16.gmra.mxu0 %v584
  %v845 = vpop.f32.mrf.mxu0
  %v846 = vadd.f32 0.0, %v845
  %v847 = vpop.f32.mrf.mxu0
  %v848 = vadd.f32 0.0, %v847
  %849 = vmatmul.bf16.gmra.mxu0 %v587
  %v850 = vpop.f32.mrf.mxu0
  %v851 = vadd.f32 0.0, %v850
  %v852 = vpop.f32.mrf.mxu0
  %v853 = vadd.f32 0.0, %v852
  %854 = vmatmul.bf16.gmra.mxu0 %v590
  %v855 = vpop.f32.mrf.mxu0
  %v856 = vadd.f32 0.0, %v855
  %v857 = vpop.f32.mrf.mxu0
  %v858 = vadd.f32 0.0, %v857
  %859 = vmatmul.bf16.gmra.mxu0 %v593
  %v860 = vpop.f32.mrf.mxu0
  %v861 = vadd.f32 0.0, %v860
  %v862 = vpop.f32.mrf.mxu0
  %v863 = vadd.f32 0.0, %v862
  %864 = vmatmul.bf16.gmra.mxu0 %v596
  %v865 = vpop.f32.mrf.mxu0
  %v866 = vadd.f32 0.0, %v865
  %v867 = vpop.f32.mrf.mxu0
  %v868 = vadd.f32 0.0, %v867
  %869 = vmatmul.bf16.gmra.mxu0 %v599
  %v870 = vpop.f32.mrf.mxu0
  %v871 = vadd.f32 0.0, %v870
  %v872 = vpop.f32.mrf.mxu0
  %v873 = vadd.f32 0.0, %v872
  %874 = vmatmul.bf16.gmra.mxu0 %v602
  %v875 = vpop.f32.mrf.mxu0
  %v876 = vadd.f32 0.0, %v875
  %v877 = vpop.f32.mrf.mxu0
  %v878 = vadd.f32 0.0, %v877
  %879 = vmatmul.bf16.gmra.mxu0 %v605
  %v880 = vpop.f32.mrf.mxu0
  %v881 = vadd.f32 0.0, %v880
  %v882 = vpop.f32.mrf.mxu0
  %v883 = vadd.f32 0.0, %v882
  %884 = vmatmul.bf16.gmra.mxu0 %v608
  %v885 = vpop.f32.mrf.mxu0
  %v886 = vadd.f32 0.0, %v885
  %v887 = vpop.f32.mrf.mxu0
  %v888 = vadd.f32 0.0, %v887
  %889 = vmatmul.bf16.gmra.mxu0 %v611
  %v890 = vpop.f32.mrf.mxu0
  %v891 = vadd.f32 0.0, %v890
  %v892 = vpop.f32.mrf.mxu0
  %v893 = vadd.f32 0.0, %v892
  %894 = vmatmul.bf16.gmra.mxu0 %v614
  %v895 = vpop.f32.mrf.mxu0
  %v896 = vadd.f32 0.0, %v895
  %v897 = vpop.f32.mrf.mxu0
  %v898 = vadd.f32 0.0, %v897
  %899 = vmatmul.bf16.gmra.mxu0 %v617
  %v900 = vpop.f32.mrf.mxu0
  %v901 = vadd.f32 0.0, %v900
  %v902 = vpop.f32.mrf.mxu0
  %v903 = vadd.f32 0.0, %v902
  %904 = vmatmul.bf16.gmra.mxu0 %v620
  %v905 = vpop.f32.mrf.mxu0
  %v906 = vadd.f32 0.0, %v905
  %v907 = vpop.f32.mrf.mxu0
  %v908 = vadd.f32 0.0, %v907
  %909 = vmatmul.bf16.gmra.mxu0 %v623
  %v910 = vpop.f32.mrf.mxu0
  %v911 = vadd.f32 0.0, %v910
  %v912 = vpop.f32.mrf.mxu0
  %v913 = vadd.f32 0.0, %v912
  %914 = vmatmul.bf16.gmra.mxu0 %v626
  %v915 = vpop.f32.mrf.mxu0
  %v916 = vadd.f32 0.0, %v915
  %v917 = vpop.f32.mrf.mxu0
  %v918 = vadd.f32 0.0, %v917
  %919 = vmatmul.bf16.gmra.mxu0 %v629
  %v920 = vpop.f32.mrf.mxu0
  %v921 = vadd.f32 0.0, %v920
  %v922 = vpop.f32.mrf.mxu0
  %v923 = vadd.f32 0.0, %v922
  %924 = vmatmul.bf16.gmra.mxu0 %v632
  %v925 = vpop.f32.mrf.mxu0
  %v926 = vadd.f32 0.0, %v925
  %v927 = vpop.f32.mrf.mxu0
  %v928 = vadd.f32 0.0, %v927
  %929 = vmatmul.bf16.gmra.mxu0 %v635
  %v930 = vpop.f32.mrf.mxu0
  %v931 = vadd.f32 0.0, %v930
  %v932 = vpop.f32.mrf.mxu0
  %v933 = vadd.f32 0.0, %v932
  %934 = vmatmul.bf16.gmra.mxu0 %v638
  %v935 = vpop.f32.mrf.mxu0
  %v936 = vadd.f32 0.0, %v935
  %v937 = vpop.f32.mrf.mxu0
  %v938 = vadd.f32 0.0, %v937
  %939 = vmatmul.bf16.gmra.mxu0 %v641
  %v940 = vpop.f32.mrf.mxu0
  %v941 = vadd.f32 0.0, %v940
  %v942 = vpop.f32.mrf.mxu0
  %v943 = vadd.f32 0.0, %v942
  %944 = vmatmul.bf16.gmra.mxu0 %v644
  %v945 = vpop.f32.mrf.mxu0
  %v946 = vadd.f32 0.0, %v945
  %v947 = vpop.f32.mrf.mxu0
  %v948 = vadd.f32 0.0, %v947
  %949 = vmatmul.bf16.gmra.mxu0 %v647
  %v950 = vpop.f32.mrf.mxu0
  %v951 = vadd.f32 0.0, %v950
  %v952 = vpop.f32.mrf.mxu0
  %v953 = vadd.f32 0.0, %v952
  %954 = vmatmul.bf16.gmra.mxu0 %v650
  %v955 = vpop.f32.mrf.mxu0
  %v956 = vadd.f32 0.0, %v955
  %v957 = vpop.f32.mrf.mxu0
  %v958 = vadd.f32 0.0, %v957
  %959 = vmatmul.bf16.gmra.mxu0 %v653
  %v960 = vpop.f32.mrf.mxu0
  %v961 = vadd.f32 0.0, %v960
  %v962 = vpop.f32.mrf.mxu0
  %v963 = vadd.f32 0.0, %v962
  %964 = vmatmul.bf16.gmra.mxu0 %v656
  %v965 = vpop.f32.mrf.mxu0
  %v966 = vadd.f32 0.0, %v965
  %v967 = vpop.f32.mrf.mxu0
  %v968 = vadd.f32 0.0, %v967
  %969 = vmatmul.bf16.gmra.mxu0 %v659
  %v970 = vpop.f32.mrf.mxu0
  %v971 = vadd.f32 0.0, %v970
  %v972 = vpop.f32.mrf.mxu0
  %v973 = vadd.f32 0.0, %v972
  %974 = vmatmul.bf16.gmra.mxu0 %v662
  %v975 = vpop.f32.mrf.mxu0
  %v976 = vadd.f32 0.0, %v975
  %v977 = vpop.f32.mrf.mxu0
  %v978 = vadd.f32 0.0, %v977
  %979 = vmatmul.bf16.gmra.mxu0 %v665
  %v980 = vpop.f32.mrf.mxu0
  %v981 = vadd.f32 0.0, %v980
  %v982 = vpop.f32.mrf.mxu0
  %v983 = vadd.f32 0.0, %v982
  %984 = vmatmul.bf16.gmra.mxu0 %v668
  %v985 = vpop.f32.mrf.mxu0
  %v986 = vadd.f32 0.0, %v985
  %v987 = vpop.f32.mrf.mxu0
  %v988 = vadd.f32 0.0, %v987
  %989 = vmatmul.bf16.gmra.mxu0 %v671
  %v990 = vpop.f32.mrf.mxu0
  %v991 = vadd.f32 0.0, %v990
  %v992 = vpop.f32.mrf.mxu0
  %v993 = vadd.f32 0.0, %v992
  %994 = vmatmul.bf16.gmra.mxu0 %v674
  %v995 = vpop.f32.mrf.mxu0
  %v996 = vadd.f32 0.0, %v995
  %v997 = vpop.f32.mrf.mxu0
  %v998 = vadd.f32 0.0, %v997
  %999 = vmatmul.bf16.gmra.mxu0 %v677
  %v1000 = vpop.f32.mrf.mxu0
  %v1001 = vadd.f32 0.0, %v1000
  %v1002 = vpop.f32.mrf.mxu0
  %v1003 = vadd.f32 0.0, %v1002
  %1004 = vmatmul.bf16.gmra.mxu0 %v680
  %v1005 = vpop.f32.mrf.mxu0
  %v1006 = vadd.f32 0.0, %v1005
  %v1007 = vpop.f32.mrf.mxu0
  %v1008 = vadd.f32 0.0, %v1007
  %1009 = vmatmul.bf16.gmra.mxu0 %v683
  %v1010 = vpop.f32.mrf.mxu0
  %v1011 = vadd.f32 0.0, %v1010
  %v1012 = vpop.f32.mrf.mxu0
  %v1013 = vadd.f32 0.0, %v1012
  %1014 = vmatmul.bf16.gmra.mxu0 %v686
  %v1015 = vpop.f32.mrf.mxu0
  %v1016 = vadd.f32 0.0, %v1015
  %v1017 = vpop.f32.mrf.mxu0
  %v1018 = vadd.f32 0.0, %v1017
  %1019 = vmatmul.bf16.gmra.mxu0 %v689
  %v1020 = vpop.f32.mrf.mxu0
  %v1021 = vadd.f32 0.0, %v1020
  %v1022 = vpop.f32.mrf.mxu0
  %v1023 = vadd.f32 0.0, %v1022
  %1024 = vmatmul.bf16.gmra.mxu0 %v692
  %v1025 = vpop.f32.mrf.mxu0
  %v1026 = vadd.f32 0.0, %v1025
  %v1027 = vpop.f32.mrf.mxu0
  %v1028 = vadd.f32 0.0, %v1027
  %1029 = vmatmul.bf16.gmra.mxu0 %v695
  %v1030 = vpop.f32.mrf.mxu0
  %v1031 = vadd.f32 0.0, %v1030
  %v1032 = vpop.f32.mrf.mxu0
  %v1033 = vadd.f32 0.0, %v1032
  %1034 = vmatmul.bf16.gmra.mxu0 %v698
  %v1035 = vpop.f32.mrf.mxu0
  %v1036 = vadd.f32 0.0, %v1035
  %v1037 = vpop.f32.mrf.mxu0
  %v1038 = vadd.f32 0.0, %v1037
  %1039 = vmatmul.bf16.gmra.mxu0 %v701
  %v1040 = vpop.f32.mrf.mxu0
  %v1041 = vadd.f32 0.0, %v1040
  %v1042 = vpop.f32.mrf.mxu0
  %v1043 = vadd.f32 0.0, %v1042
  %1044 = vmatmul.bf16.gmra.mxu0 %v704
  %v1045 = vpop.f32.mrf.mxu0
  %v1046 = vadd.f32 0.0, %v1045
  %v1047 = vpop.f32.mrf.mxu0
  %v1048 = vadd.f32 0.0, %v1047
  %1049 = vmatmul.bf16.gmra.mxu0 %v707
  %v1050 = vpop.f32.mrf.mxu0
  %v1051 = vadd.f32 0.0, %v1050
  %v1052 = vpop.f32.mrf.mxu0
  %v1053 = vadd.f32 0.0, %v1052
  %1054 = vmatmul.bf16.gmra.mxu0 %v710
  %v1055 = vpop.f32.mrf.mxu0
  %v1056 = vadd.f32 0.0, %v1055
  %v1057 = vpop.f32.mrf.mxu0
  %v1058 = vadd.f32 0.0, %v1057
  %1059 = vmatmul.bf16.gmra.mxu0 %v713
  %v1060 = vpop.f32.mrf.mxu0
  %v1061 = vadd.f32 0.0, %v1060
  %v1062 = vpop.f32.mrf.mxu0
  %v1063 = vadd.f32 0.0, %v1062
  %1064 = vmatmul.bf16.gmra.mxu0 %v716
  %v1065 = vpop.f32.mrf.mxu0
  %v1066 = vadd.f32 0.0, %v1065
  %v1067 = vpop.f32.mrf.mxu0
  %v1068 = vadd.f32 0.0, %v1067
  %1069 = vmatmul.bf16.gmra.mxu0 %v719
  %v1070 = vpop.f32.mrf.mxu0
  %v1071 = vadd.f32 0.0, %v1070
  %v1072 = vpop.f32.mrf.mxu0
  %v1073 = vadd.f32 0.0, %v1072
  %1074 = vmatmul.bf16.gmra.mxu0 %v722
  %v1075 = vpop.f32.mrf.mxu0
  %v1076 = vadd.f32 0.0, %v1075
  %v1077 = vpop.f32.mrf.mxu0
  %v1078 = vadd.f32 0.0, %v1077
  %1079 = vmatmul.bf16.gmra.mxu0 %v725
  %v1080 = vpop.f32.mrf.mxu0
  %v1081 = vadd.f32 0.0, %v1080
  %v1082 = vpop.f32.mrf.mxu0
  %v1083 = vadd.f32 0.0, %v1082
  %1084 = vmatmul.bf16.gmra.mxu0 %v728
  %v1085 = vpop.f32.mrf.mxu0
  %v1086 = vadd.f32 0.0, %v1085
  %v1087 = vpop.f32.mrf.mxu0
  %v1088 = vadd.f32 0.0, %v1087
  %1089 = vmatmul.bf16.gmra.mxu0 %v731
  %v1090 = vpop.f32.mrf.mxu0
  %v1091 = vadd.f32 0.0, %v1090
  %v1092 = vpop.f32.mrf.mxu0
  %v1093 = vadd.f32 0.0, %v1092
  %1094 = vmatmul.bf16.gmra.mxu0 %v734
  %v1095 = vpop.f32.mrf.mxu0
  %v1096 = vadd.f32 0.0, %v1095
  %v1097 = vpop.f32.mrf.mxu0
  %v1098 = vadd.f32 0.0, %v1097
  %1099 = vmatmul.bf16.gmra.mxu0 %v737
  %v1100 = vpop.f32.mrf.mxu0
  %v1101 = vadd.f32 0.0, %v1100
  %v1102 = vpop.f32.mrf.mxu0
  %v1103 = vadd.f32 0.0, %v1102
  %1104 = vmatmul.bf16.gmra.mxu0 %v740
  %v1105 = vpop.f32.mrf.mxu0
  %v1106 = vadd.f32 0.0, %v1105
  %v1107 = vpop.f32.mrf.mxu0
  %v1108 = vadd.f32 0.0, %v1107
  %1109 = vmatmul.bf16.gmra.mxu0 %v743
  %v1110 = vpop.f32.mrf.mxu0
  %v1111 = vadd.f32 0.0, %v1110
  %v1112 = vpop.f32.mrf.mxu0
  %v1113 = vadd.f32 0.0, %v1112
  %1114 = vmatmul.bf16.gmra.mxu0 %v746
  %v1115 = vpop.f32.mrf.mxu0
  %v1116 = vadd.f32 0.0, %v1115
  %v1117 = vpop.f32.mrf.mxu0
  %v1118 = vadd.f32 0.0, %v1117
  %1119 = vmatmul.bf16.gmra.mxu0 %v749
  %v1120 = vpop.f32.mrf.mxu0
  %v1121 = vadd.f32 0.0, %v1120
  %v1122 = vpop.f32.mrf.mxu0
  %v1123 = vadd.f32 0.0, %v1122
  %1124 = vmatmul.bf16.gmra.mxu0 %v752
  %v1125 = vpop.f32.mrf.mxu0
  %v1126 = vadd.f32 0.0, %v1125
  %v1127 = vpop.f32.mrf.mxu0
  %v1128 = vadd.f32 0.0, %v1127
  %1129 = vdwg.mxu0
  %v1130 = vmax.f32 %v771, %v861
  %v1131 = vmax.f32 %v773, %v863
  %v1132 = vmax.f32 %v776, %v866
  %v1133 = vmax.f32 %v778, %v868
  %v1134 = vmax.f32 %v781, %v871
  %v1135 = vmax.f32 %v783, %v873
  %v1136 = vmax.f32 %v786, %v876
  %v1137 = vmax.f32 %v788, %v878
  %v1138 = vmax.f32 %v791, %v881
  %v1139 = vmax.f32 %v793, %v883
  %v1140 = vmax.f32 %v796, %v886
  %v1141 = vmax.f32 %v798, %v888
  %v1142 = vmax.f32 %v801, %v891
  %v1143 = vmax.f32 %v803, %v893
  %v1144 = vmax.f32 %v806, %v896
  %v1145 = vmax.f32 %v808, %v898
  %v1146 = vmax.f32 %v811, %v901
  %v1147 = vmax.f32 %v813, %v903
  %v1148 = vmax.f32 %v816, %v906
  %v1149 = vmax.f32 %v818, %v908
  %v1150 = vmax.f32 %v821, %v911
  %v1151 = vmax.f32 %v823, %v913
  %v1152 = vmax.f32 %v826, %v916
  %v1153 = vmax.f32 %v828, %v918
  %v1154 = vmax.f32 %v831, %v921
  %v1155 = vmax.f32 %v833, %v923
  %v1156 = vmax.f32 %v836, %v926
  %v1157 = vmax.f32 %v838, %v928
  %v1158 = vmax.f32 %v841, %v931
  %v1159 = vmax.f32 %v843, %v933
  %v1160 = vmax.f32 %v846, %v936
  %v1161 = vmax.f32 %v848, %v938
  %v1162 = vmax.f32 %v851, %v941
  %v1163 = vmax.f32 %v853, %v943
  %v1164 = vmax.f32 %v856, %v946
  %v1165 = vmax.f32 %v858, %v948
  %v1166 = vmax.f32 %v1130, %v951
  %v1167 = vmax.f32 %v1131, %v953
  %v1168 = vmax.f32 %v1132, %v956
  %v1169 = vmax.f32 %v1133, %v958
  %v1170 = vmax.f32 %v1134, %v961
  %v1171 = vmax.f32 %v1135, %v963
  %v1172 = vmax.f32 %v1136, %v966
  %v1173 = vmax.f32 %v1137, %v968
  %v1174 = vmax.f32 %v1138, %v971
  %v1175 = vmax.f32 %v1139, %v973
  %v1176 = vmax.f32 %v1140, %v976
  %v1177 = vmax.f32 %v1141, %v978
  %v1178 = vmax.f32 %v1142, %v981
  %v1179 = vmax.f32 %v1143, %v983
  %v1180 = vmax.f32 %v1144, %v986
  %v1181 = vmax.f32 %v1145, %v988
  %v1182 = vmax.f32 %v1146, %v991
  %v1183 = vmax.f32 %v1147, %v993
  %v1184 = vmax.f32 %v1148, %v996
  %v1185 = vmax.f32 %v1149, %v998
  %v1186 = vmax.f32 %v1150, %v1001
  %v1187 = vmax.f32 %v1151, %v1003
  %v1188 = vmax.f32 %v1152, %v1006
  %v1189 = vmax.f32 %v1153, %v1008
  %v1190 = vmax.f32 %v1154, %v1011
  %v1191 = vmax.f32 %v1155, %v1013
  %v1192 = vmax.f32 %v1156, %v1016
  %v1193 = vmax.f32 %v1157, %v1018
  %v1194 = vmax.f32 %v1158, %v1021
  %v1195 = vmax.f32 %v1159, %v1023
  %v1196 = vmax.f32 %v1160, %v1026
  %v1197 = vmax.f32 %v1161, %v1028
  %v1198 = vmax.f32 %v1162, %v1031
  %v1199 = vmax.f32 %v1163, %v1033
  %v1200 = vmax.f32 %v1164, %v1036
  %v1201 = vmax.f32 %v1165, %v1038
  %v1202 = vmax.f32 %v1166, %v1041
  %v1203 = vmax.f32 %v1167, %v1043
  %v1204 = vmax.f32 %v1168, %v1046
  %v1205 = vmax.f32 %v1169, %v1048
  %v1206 = vmax.f32 %v1170, %v1051
  %v1207 = vmax.f32 %v1171, %v1053
  %v1208 = vmax.f32 %v1172, %v1056
  %v1209 = vmax.f32 %v1173, %v1058
  %v1210 = vmax.f32 %v1174, %v1061
  %v1211 = vmax.f32 %v1175, %v1063
  %v1212 = vmax.f32 %v1176, %v1066
  %v1213 = vmax.f32 %v1177, %v1068
  %v1214 = vmax.f32 %v1178, %v1071
  %v1215 = vmax.f32 %v1179, %v1073
  %v1216 = vmax.f32 %v1180, %v1076
  %v1217 = vmax.f32 %v1181, %v1078
  %v1218 = vmax.f32 %v1182, %v1081
  %v1219 = vmax.f32 %v1183, %v1083
  %v1220 = vmax.f32 %v1184, %v1086
  %v1221 = vmax.f32 %v1185, %v1088
  %v1222 = vmax.f32 %v1186, %v1091
  %v1223 = vmax.f32 %v1187, %v1093
  %v1224 = vmax.f32 %v1188, %v1096
  %v1225 = vmax.f32 %v1189, %v1098
  %v1226 = vmax.f32 %v1190, %v1101
  %v1227 = vmax.f32 %v1191, %v1103
  %v1228 = vmax.f32 %v1192, %v1106
  %v1229 = vmax.f32 %v1193, %v1108
  %v1230 = vmax.f32 %v1194, %v1111
  %v1231 = vmax.f32 %v1195, %v1113
  %v1232 = vmax.f32 %v1196, %v1116
  %v1233 = vmax.f32 %v1197, %v1118
  %v1234 = vmax.f32 %v1198, %v1121
  %v1235 = vmax.f32 %v1199, %v1123
  %v1236 = vmax.f32 %v1200, %v1126
  %v1237 = vmax.f32 %v1201, %v1128
  %v1238 = vld [vmem:[%s2] sm:$0x1]
  %v1240 = vperm.slane %v1238, 0
  %v1242 = vadd.f32 %v1202, %v1240
  %v1243 = vadd.f32 %v1203, %v1240
  %v1244 = vadd.f32 %v1204, %v1240
  %v1245 = vadd.f32 %v1205, %v1240
  %v1246 = vadd.f32 %v1206, %v1240
  %v1247 = vadd.f32 %v1207, %v1240
  %v1248 = vadd.f32 %v1208, %v1240
  %v1249 = vadd.f32 %v1209, %v1240
  %v1250 = vadd.f32 %v1210, %v1240
  %v1251 = vadd.f32 %v1211, %v1240
  %v1252 = vadd.f32 %v1212, %v1240
  %v1253 = vadd.f32 %v1213, %v1240
  %v1254 = vadd.f32 %v1214, %v1240
  %v1255 = vadd.f32 %v1215, %v1240
  %v1256 = vadd.f32 %v1216, %v1240
  %v1257 = vadd.f32 %v1217, %v1240
  %v1258 = vadd.f32 %v1218, %v1240
  %v1259 = vadd.f32 %v1219, %v1240
  %v1260 = vadd.f32 %v1220, %v1240
  %v1261 = vadd.f32 %v1221, %v1240
  %v1262 = vadd.f32 %v1222, %v1240
  %v1263 = vadd.f32 %v1223, %v1240
  %v1264 = vadd.f32 %v1224, %v1240
  %v1265 = vadd.f32 %v1225, %v1240
  %v1266 = vadd.f32 %v1226, %v1240
  %v1267 = vadd.f32 %v1227, %v1240
  %v1268 = vadd.f32 %v1228, %v1240
  %v1269 = vadd.f32 %v1229, %v1240
  %v1270 = vadd.f32 %v1230, %v1240
  %v1271 = vadd.f32 %v1231, %v1240
  %v1272 = vadd.f32 %v1232, %v1240
  %v1273 = vadd.f32 %v1233, %v1240
  %v1274 = vadd.f32 %v1234, %v1240
  %v1275 = vadd.f32 %v1235, %v1240
  %v1276 = vadd.f32 %v1236, %v1240
  %v1277 = vadd.f32 %v1237, %v1240
  %v1278 = vmax.f32 %v1242, 0.0
  %v1279 = vmax.f32 %v1243, 0.0
  %v1280 = vmax.f32 %v1244, 0.0
  %v1281 = vmax.f32 %v1245, 0.0
  %v1282 = vmax.f32 %v1246, 0.0
  %v1283 = vmax.f32 %v1247, 0.0
  %v1284 = vmax.f32 %v1248, 0.0
  %v1285 = vmax.f32 %v1249, 0.0
  %v1286 = vmax.f32 %v1250, 0.0
  %v1287 = vmax.f32 %v1251, 0.0
  %v1288 = vmax.f32 %v1252, 0.0
  %v1289 = vmax.f32 %v1253, 0.0
  %v1290 = vmax.f32 %v1254, 0.0
  %v1291 = vmax.f32 %v1255, 0.0
  %v1292 = vmax.f32 %v1256, 0.0
  %v1293 = vmax.f32 %v1257, 0.0
  %v1294 = vmax.f32 %v1258, 0.0
  %v1295 = vmax.f32 %v1259, 0.0
  %v1296 = vmax.f32 %v1260, 0.0
  %v1297 = vmax.f32 %v1261, 0.0
  %v1298 = vmax.f32 %v1262, 0.0
  %v1299 = vmax.f32 %v1263, 0.0
  %v1300 = vmax.f32 %v1264, 0.0
  %v1301 = vmax.f32 %v1265, 0.0
  %v1302 = vmax.f32 %v1266, 0.0
  %v1303 = vmax.f32 %v1267, 0.0
  %v1304 = vmax.f32 %v1268, 0.0
  %v1305 = vmax.f32 %v1269, 0.0
  %v1306 = vmax.f32 %v1270, 0.0
  %v1307 = vmax.f32 %v1271, 0.0
  %v1308 = vmax.f32 %v1272, 0.0
  %v1309 = vmax.f32 %v1273, 0.0
  %v1310 = vmax.f32 %v1274, 0.0
  %v1311 = vmax.f32 %v1275, 0.0
  %v1312 = vmax.f32 %v1276, 0.0
  %v1313 = vmax.f32 %v1277, 0.0
  %v1314 = vpack.c.bf16 %v1278, %v1278
  %v1315 = vpack.c.bf16 %v1279, %v1279
  %v1316 = vpack.c.bf16 %v1280, %v1280
  %v1317 = vpack.c.bf16 %v1281, %v1281
  %v1318 = vpack.c.bf16 %v1282, %v1282
  %v1319 = vpack.c.bf16 %v1283, %v1283
  %v1320 = vpack.c.bf16 %v1284, %v1284
  %v1321 = vpack.c.bf16 %v1285, %v1285
  %v1322 = vpack.c.bf16 %v1286, %v1286
  %v1323 = vpack.c.bf16 %v1287, %v1287
  %v1324 = vpack.c.bf16 %v1288, %v1288
  %v1325 = vpack.c.bf16 %v1289, %v1289
  %v1326 = vpack.c.bf16 %v1290, %v1290
  %v1327 = vpack.c.bf16 %v1291, %v1291
  %v1328 = vpack.c.bf16 %v1292, %v1292
  %v1329 = vpack.c.bf16 %v1293, %v1293
  %v1330 = vpack.c.bf16 %v1294, %v1294
  %v1331 = vpack.c.bf16 %v1295, %v1295
  %v1332 = vpack.c.bf16 %v1296, %v1296
  %v1333 = vpack.c.bf16 %v1297, %v1297
  %v1334 = vpack.c.bf16 %v1298, %v1298
  %v1335 = vpack.c.bf16 %v1299, %v1299
  %v1336 = vpack.c.bf16 %v1300, %v1300
  %v1337 = vpack.c.bf16 %v1301, %v1301
  %v1338 = vpack.c.bf16 %v1302, %v1302
  %v1339 = vpack.c.bf16 %v1303, %v1303
  %v1340 = vpack.c.bf16 %v1304, %v1304
  %v1341 = vpack.c.bf16 %v1305, %v1305
  %v1342 = vpack.c.bf16 %v1306, %v1306
  %v1343 = vpack.c.bf16 %v1307, %v1307
  %v1344 = vpack.c.bf16 %v1308, %v1308
  %v1345 = vpack.c.bf16 %v1309, %v1309
  %v1346 = vpack.c.bf16 %v1310, %v1310
  %v1347 = vpack.c.bf16 %v1311, %v1311
  %v1348 = vpack.c.bf16 %v1312, %v1312
  %v1349 = vpack.c.bf16 %v1313, %v1313
  %1350 = vst [vmem:[%s3] sm:$0xf] %v1314
  %1351 = vst [vmem:[%s3 + $0x4] sm:$0xf] %v1315
  %1352 = vst [vmem:[%s3 + $0x8] sm:$0xf] %v1316
  %1353 = vst [vmem:[%s3 + $0xc] sm:$0xf] %v1317
  %1354 = vst [vmem:[%s3 + $0x10] sm:$0xf] %v1318
  %1355 = vst [vmem:[%s3 + $0x14] sm:$0xf] %v1319
  %1356 = vst [vmem:[%s3 + $0x18] sm:$0xf] %v1320
  %1357 = vst [vmem:[%s3 + $0x1c] sm:$0xf] %v1321
  %1358 = vst [vmem:[%s3 + $0x20] sm:$0xf] %v1322
  %1359 = vst [vmem:[%s3 + $0x24] sm:$0xf] %v1323
  %1360 = vst [vmem:[%s3 + $0x28] sm:$0xf] %v1324
  %1361 = vst [vmem:[%s3 + $0x2c] sm:$0xf] %v1325
  %1362 = vst [vmem:[%s3 + $0x30] sm:$0xf] %v1326
  %1363 = vst [vmem:[%s3 + $0x34] sm:$0xf] %v1327
  %1364 = vst [vmem:[%s3 + $0x38] sm:$0xf] %v1328
  %1365 = vst [vmem:[%s3 + $0x3c] sm:$0xf] %v1329
  %1366 = vst [vmem:[%s3 + $0x40] sm:$0xf] %v1330
  %1367 = vst [vmem:[%s3 + $0x44] sm:$0xf] %v1331
  %1368 = vst [vmem:[%s3 + $0x48] sm:$0xf] %v1332
  %1369 = vst [vmem:[%s3 + $0x4c] sm:$0xf] %v1333
  %1370 = vst [vmem:[%s3 + $0x50] sm:$0xf] %v1334
  %1371 = vst [vmem:[%s3 + $0x54] sm:$0xf] %v1335
  %1372 = vst [vmem:[%s3 + $0x58] sm:$0xf] %v1336
  %1373 = vst [vmem:[%s3 + $0x5c] sm:$0xf] %v1337
  %1374 = vst [vmem:[%s3 + $0x60] sm:$0xf] %v1338
  %1375 = vst [vmem:[%s3 + $0x64] sm:$0xf] %v1339
  %1376 = vst [vmem:[%s3 + $0x68] sm:$0xf] %v1340
  %1377 = vst [vmem:[%s3 + $0x6c] sm:$0xf] %v1341
  %1378 = vst [vmem:[%s3 + $0x70] sm:$0xf] %v1342
  %1379 = vst [vmem:[%s3 + $0x74] sm:$0xf] %v1343
  %1380 = vst [vmem:[%s3 + $0x78] sm:$0xf] %v1344
  %1381 = vst [vmem:[%s3 + $0x7c] sm:$0xf] %v1345
  %1382 = vst [vmem:[%s3 + $0x80] sm:$0xf] %v1346
  %1383 = vst [vmem:[%s3 + $0x84] sm:$0xf] %v1347
  %1384 = vst [vmem:[%s3 + $0x88] sm:$0xf] %v1348
  %1385 = vst [vmem:[%s3 + $0x8c] sm:$0xf] %v1349
  // Predicated region
  $region14: #{cnn_mnist_forward.3} parent=0 // pred_check
    _
  $region15: #{cnn_mnist_forward.3} parent=0 // pred_check_branch
    %1387 = sbr.rel (0) target = $region17
  $region16: #{cnn_mnist_forward.3} parent=0 // pred_region
    _
  $region17: #{cnn_mnist_forward.3} parent=0 // pred_fallthru
    _
  // Predicated region
  $region18: #{cnn_mnist_forward.3} parent=0 // pred_check
    _
  $region19: #{cnn_mnist_forward.3} parent=0 // pred_check_branch
    %1389 = sbr.rel (0) target = $region21
  $region20: #{cnn_mnist_forward.3} parent=0 // pred_region
    _
  $region21: #{cnn_mnist_forward.3} parent=0 // pred_fallthru
    _

// kernel: cnn_mnist_forward.4
$region0: #{cnn_mnist_forward.4}
  #allocation0 [shape = 'u32[]', space=smem, size = 0x4, offset = 0x4, fixed_abs, tag = 'smem constant byte address 0x4 - core index']
  #allocation1 [shape = 'u32[72,128]{1,0:T(1,128)}', space=vmem, size = 0x9000, scoped, tag = 'internal scratch']
  %s0 = inlined_call_operand.vmem [shape: bf16[4,32,250], index: 0, kind: input, shape index: {}]
  %s1 = inlined_call_operand.vmem [shape: bf16[250,128], index: 1, kind: input, shape index: {}]
  %s2 = inlined_call_operand.vmem [shape: f32[1,128], index: 2, kind: input, shape index: {}]
  %s3 = inlined_call_operand.vmem [shape: bf16[32,128], index: 3, kind: output, shape index: {}]
  %s4 = sld [smem:[#allocation0]]
  $region22: #{cnn_mnist_forward.4} parent=0
    _
  %s6 = ssub.s32 1, %s4
  %s7 = scalar_select 0, %s6, %s4
  // Predicated region
  $region2: #{cnn_mnist_forward.4} parent=0 // pred_check
    _
  $region3: #{cnn_mnist_forward.4} parent=0 // pred_check_branch
    %9 = sbr.rel (0) target = $region5
  $region4: #{cnn_mnist_forward.4} parent=0 // pred_region
    _
  $region5: #{cnn_mnist_forward.4} parent=0 // pred_fallthru
    _
  // Predicated region
  $region6: #{cnn_mnist_forward.4} parent=0 // pred_check
    _
  $region7: #{cnn_mnist_forward.4} parent=0 // pred_check_branch
    %11 = sbr.rel (0) target = $region9
  $region8: #{cnn_mnist_forward.4} parent=0 // pred_region
    _
  $region9: #{cnn_mnist_forward.4} parent=0 // pred_fallthru
    _
  // Predicated region
  $region10: #{cnn_mnist_forward.4} parent=0 // pred_check
    _
  $region11: #{cnn_mnist_forward.4} parent=0 // pred_check_branch
    %13 = sbr.rel (0) target = $region13
  $region12: #{cnn_mnist_forward.4} parent=0 // pred_region
    _
  $region13: #{cnn_mnist_forward.4} parent=0 // pred_fallthru
    _
  %v14 = vld [vmem:[%s0] sm:$0xff]
  %v15 = vld [vmem:[%s0 + $0x8] sm:$0xff]
  %v16 = vld [vmem:[%s0 + $0x10] sm:$0xff]
  %v17 = vld [vmem:[%s0 + $0x18] sm:$0xff]
  %s18 = scalar_lea.vmem %s0, 32
  %v19 = vld [vmem:[%s18] sm:$0xff]
  %v20 = vld [vmem:[%s18 + $0x8] sm:$0xff]
  %v21 = vld [vmem:[%s18 + $0x10] sm:$0xff]
  %v22 = vld [vmem:[%s18 + $0x18] sm:$0xff]
  %s23 = scalar_lea.vmem %s0, 64
  %v24 = vld [vmem:[%s23] sm:$0xff]
  %v25 = vld [vmem:[%s23 + $0x8] sm:$0xff]
  %v26 = vld [vmem:[%s23 + $0x10] sm:$0xff]
  %v27 = vld [vmem:[%s23 + $0x18] sm:$0xff]
  %s28 = scalar_lea.vmem %s0, 96
  %v29 = vld [vmem:[%s28] sm:$0xff]
  %v30 = vld [vmem:[%s28 + $0x8] sm:$0xff]
  %v31 = vld [vmem:[%s28 + $0x10] sm:$0xff]
  %v32 = vld [vmem:[%s28 + $0x18] sm:$0xff]
  %v37 = vunpack.c.l.b16 %v14
  %v38 = vunpack.c.h.b16 %v14
  %v39 = vunpack.c.l.b16 %v15
  %v40 = vunpack.c.h.b16 %v15
  %v41 = vunpack.c.l.b16 %v16
  %v42 = vunpack.c.h.b16 %v16
  %v43 = vunpack.c.l.b16 %v17
  %v44 = vunpack.c.h.b16 %v17
  %v45 = vpack.c.b16 %v39, %v37
  %v46 = vpack.c.b16 %v40, %v38
  %v47 = vpack.c.b16 %v43, %v41
  %v48 = vpack.c.b16 %v44, %v42
  %v55 = vunpack.c.l.b16 %v19
  %v56 = vunpack.c.h.b16 %v19
  %v57 = vunpack.c.l.b16 %v20
  %v58 = vunpack.c.h.b16 %v20
  %v59 = vunpack.c.l.b16 %v21
  %v60 = vunpack.c.h.b16 %v21
  %v61 = vunpack.c.l.b16 %v22
  %v62 = vunpack.c.h.b16 %v22
  %v63 = vpack.c.b16 %v57, %v55
  %v64 = vpack.c.b16 %v58, %v56
  %v65 = vpack.c.b16 %v61, %v59
  %v66 = vpack.c.b16 %v62, %v60
  %v73 = vunpack.c.l.b16 %v24
  %v74 = vunpack.c.h.b16 %v24
  %v75 = vunpack.c.l.b16 %v25
  %v76 = vunpack.c.h.b16 %v25
  %v77 = vunpack.c.l.b16 %v26
  %v78 = vunpack.c.h.b16 %v26
  %v79 = vunpack.c.l.b16 %v27
  %v80 = vunpack.c.h.b16 %v27
  %v81 = vpack.c.b16 %v75, %v73
  %v82 = vpack.c.b16 %v76, %v74
  %v83 = vpack.c.b16 %v79, %v77
  %v84 = vpack.c.b16 %v80, %v78
  %v91 = vunpack.c.l.b16 %v29
  %v92 = vunpack.c.h.b16 %v29
  %v93 = vunpack.c.l.b16 %v30
  %v94 = vunpack.c.h.b16 %v30
  %v95 = vunpack.c.l.b16 %v31
  %v96 = vunpack.c.h.b16 %v31
  %v97 = vunpack.c.l.b16 %v32
  %v98 = vunpack.c.h.b16 %v32
  %v99 = vpack.c.b16 %v93, %v91
  %v100 = vpack.c.b16 %v94, %v92
  %v101 = vpack.c.b16 %v97, %v95
  %v102 = vpack.c.b16 %v98, %v96
  %v105 = vld [vmem:[%s1] sm:$0xf]
  %v106 = vld [vmem:[%s1 + $0x4] sm:$0xf]
  %v107 = vld [vmem:[%s1 + $0x8] sm:$0xf]
  %v108 = vld [vmem:[%s1 + $0xc] sm:$0xf]
  %v109 = vld [vmem:[%s1 + $0x10] sm:$0xf]
  %v110 = vld [vmem:[%s1 + $0x14] sm:$0xf]
  %v111 = vld [vmem:[%s1 + $0x18] sm:$0xf]
  %v112 = vld [vmem:[%s1 + $0x1c] sm:$0xf]
  %v113 = vld [vmem:[%s1 + $0x20] sm:$0xf]
  %v114 = vld [vmem:[%s1 + $0x24] sm:$0xf]
  %v115 = vld [vmem:[%s1 + $0x28] sm:$0xf]
  %v116 = vld [vmem:[%s1 + $0x2c] sm:$0xf]
  %v117 = vld [vmem:[%s1 + $0x30] sm:$0xf]
  %v118 = vld [vmem:[%s1 + $0x34] sm:$0xf]
  %v119 = vld [vmem:[%s1 + $0x38] sm:$0xf]
  %v120 = vld [vmem:[%s1 + $0x3c] sm:$0xf]
  %v121 = vld [vmem:[%s1 + $0x40] sm:$0xf]
  %v122 = vld [vmem:[%s1 + $0x44] sm:$0xf]
  %v123 = vld [vmem:[%s1 + $0x48] sm:$0xf]
  %v124 = vld [vmem:[%s1 + $0x4c] sm:$0xf]
  %v125 = vld [vmem:[%s1 + $0x50] sm:$0xf]
  %v126 = vld [vmem:[%s1 + $0x54] sm:$0xf]
  %v127 = vld [vmem:[%s1 + $0x58] sm:$0xf]
  %v128 = vld [vmem:[%s1 + $0x5c] sm:$0xf]
  %v129 = vld [vmem:[%s1 + $0x60] sm:$0xf]
  %v130 = vld [vmem:[%s1 + $0x64] sm:$0xf]
  %v131 = vld [vmem:[%s1 + $0x68] sm:$0xf]
  %v132 = vld [vmem:[%s1 + $0x6c] sm:$0xf]
  %v133 = vld [vmem:[%s1 + $0x70] sm:$0xf]
  %v134 = vld [vmem:[%s1 + $0x74] sm:$0xf]
  %v135 = vld [vmem:[%s1 + $0x78] sm:$0xf]
  %v136 = vld [vmem:[%s1 + $0x7c] sm:$0x1]
  %v169 = vunpack.c.l.b16 %v105
  %v170 = vunpack.c.l.b16 %v106
  %v171 = vunpack.c.l.b16 %v107
  %v172 = vunpack.c.l.b16 %v108
  %v173 = vunpack.c.l.b16 %v109
  %v174 = vunpack.c.l.b16 %v110
  %v175 = vunpack.c.l.b16 %v111
  %v176 = vunpack.c.l.b16 %v112
  %v177 = vunpack.c.l.b16 %v113
  %v178 = vunpack.c.l.b16 %v114
  %v179 = vunpack.c.l.b16 %v115
  %v180 = vunpack.c.l.b16 %v116
  %v181 = vunpack.c.l.b16 %v117
  %v182 = vunpack.c.l.b16 %v118
  %v183 = vunpack.c.l.b16 %v119
  %v184 = vunpack.c.l.b16 %v120
  %v185 = vunpack.c.l.b16 %v121
  %v186 = vunpack.c.l.b16 %v122
  %v187 = vunpack.c.l.b16 %v123
  %v188 = vunpack.c.l.b16 %v124
  %v189 = vunpack.c.l.b16 %v125
  %v190 = vunpack.c.l.b16 %v126
  %v191 = vunpack.c.l.b16 %v127
  %v192 = vunpack.c.l.b16 %v128
  %v193 = vunpack.c.l.b16 %v129
  %v194 = vunpack.c.l.b16 %v130
  %v195 = vunpack.c.l.b16 %v131
  %v196 = vunpack.c.l.b16 %v132
  %v197 = vunpack.c.l.b16 %v133
  %v198 = vunpack.c.l.b16 %v134
  %v199 = vunpack.c.l.b16 %v135
  %v200 = vunpack.c.l.b16 %v136
  %v201 = vpack.c.b16 %v170, %v169
  %v202 = vpack.c.b16 %v172, %v171
  %v203 = vpack.c.b16 %v174, %v173
  %v204 = vpack.c.b16 %v176, %v175
  %v205 = vpack.c.b16 %v178, %v177
  %v206 = vpack.c.b16 %v180, %v179
  %v207 = vpack.c.b16 %v182, %v181
  %v208 = vpack.c.b16 %v184, %v183
  %v209 = vpack.c.b16 %v186, %v185
  %v210 = vpack.c.b16 %v188, %v187
  %v211 = vpack.c.b16 %v190, %v189
  %v212 = vpack.c.b16 %v192, %v191
  %v213 = vpack.c.b16 %v194, %v193
  %v214 = vpack.c.b16 %v196, %v195
  %v215 = vpack.c.b16 %v198, %v197
  %v216 = vpack.c.b16 %v200, %v199
  %vm232 = vcmask 998400
  %v234 = vsel %vm232, %v46, 0
  %v237 = vsel %vm232, %v48, 0
  %v240 = vsel %vm232, %v64, 0
  %v243 = vsel %vm232, %v66, 0
  %v246 = vsel %vm232, %v82, 0
  %v249 = vsel %vm232, %v84, 0
  %v252 = vsel %vm232, %v100, 0
  %v255 = vsel %vm232, %v102, 0
  %vm257 = vcmask 1044480
  %v259 = vsel %vm257, %v216, 0
  %261 = vmatpush.bf16.msra.mxu0 %v208
  %262 = vmatpush.bf16.msra.mxu0 %v207
  %263 = vmatpush.bf16.msra.mxu0 %v206
  %264 = vmatpush.bf16.msra.mxu0 %v205
  %265 = vmatpush.bf16.msra.mxu0 %v204
  %266 = vmatpush.bf16.msra.mxu0 %v203
  %267 = vmatpush.bf16.msra.mxu0 %v202
  %268 = vmatpush.bf16.msra.mxu0 %v201
  %269 = vmatmul.bf16.gmra.mxu0 %v45
  %v270 = vpop.f32.mrf.mxu0
  %v271 = vadd.f32 0.0, %v270
  %v272 = vpop.f32.mrf.mxu0
  %v273 = vadd.f32 0.0, %v272
  %274 = vmatmul.bf16.gmra.mxu0 %v47
  %v275 = vpop.f32.mrf.mxu0
  %v276 = vadd.f32 0.0, %v275
  %v277 = vpop.f32.mrf.mxu0
  %v278 = vadd.f32 0.0, %v277
  %279 = vmatmul.bf16.gmra.mxu0 %v63
  %v280 = vpop.f32.mrf.mxu0
  %v281 = vadd.f32 0.0, %v280
  %v282 = vpop.f32.mrf.mxu0
  %v283 = vadd.f32 0.0, %v282
  %284 = vmatmul.bf16.gmra.mxu0 %v65
  %v285 = vpop.f32.mrf.mxu0
  %v286 = vadd.f32 0.0, %v285
  %v287 = vpop.f32.mrf.mxu0
  %v288 = vadd.f32 0.0, %v287
  %289 = vmatmul.bf16.gmra.mxu0 %v81
  %v290 = vpop.f32.mrf.mxu0
  %v291 = vadd.f32 0.0, %v290
  %v292 = vpop.f32.mrf.mxu0
  %v293 = vadd.f32 0.0, %v292
  %294 = vmatmul.bf16.gmra.mxu0 %v83
  %v295 = vpop.f32.mrf.mxu0
  %v296 = vadd.f32 0.0, %v295
  %v297 = vpop.f32.mrf.mxu0
  %v298 = vadd.f32 0.0, %v297
  %299 = vmatmul.bf16.gmra.mxu0 %v99
  %v300 = vpop.f32.mrf.mxu0
  %v301 = vadd.f32 0.0, %v300
  %v302 = vpop.f32.mrf.mxu0
  %v303 = vadd.f32 0.0, %v302
  %304 = vmatmul.bf16.gmra.mxu0 %v101
  %v305 = vpop.f32.mrf.mxu0
  %v306 = vadd.f32 0.0, %v305
  %v307 = vpop.f32.mrf.mxu0
  %v308 = vadd.f32 0.0, %v307
  %309 = vdwg.mxu0
  %310 = vmatpush.bf16.msra.mxu0 %v259
  %311 = vmatpush.bf16.msra.mxu0 %v215
  %312 = vmatpush.bf16.msra.mxu0 %v214
  %313 = vmatpush.bf16.msra.mxu0 %v213
  %314 = vmatpush.bf16.msra.mxu0 %v212
  %315 = vmatpush.bf16.msra.mxu0 %v211
  %316 = vmatpush.bf16.msra.mxu0 %v210
  %317 = vmatpush.bf16.msra.mxu0 %v209
  %318 = vmatmul.bf16.gmra.mxu0 %v234
  %v319 = vpop.f32.mrf.mxu0
  %v320 = vadd.f32 %v271, %v319
  %v321 = vpop.f32.mrf.mxu0
  %v322 = vadd.f32 %v273, %v321
  %323 = vmatmul.bf16.gmra.mxu0 %v237
  %v324 = vpop.f32.mrf.mxu0
  %v325 = vadd.f32 %v276, %v324
  %v326 = vpop.f32.mrf.mxu0
  %v327 = vadd.f32 %v278, %v326
  %328 = vmatmul.bf16.gmra.mxu0 %v240
  %v329 = vpop.f32.mrf.mxu0
  %v330 = vadd.f32 %v281, %v329
  %v331 = vpop.f32.mrf.mxu0
  %v332 = vadd.f32 %v283, %v331
  %333 = vmatmul.bf16.gmra.mxu0 %v243
  %v334 = vpop.f32.mrf.mxu0
  %v335 = vadd.f32 %v286, %v334
  %v336 = vpop.f32.mrf.mxu0
  %v337 = vadd.f32 %v288, %v336
  %338 = vmatmul.bf16.gmra.mxu0 %v246
  %v339 = vpop.f32.mrf.mxu0
  %v340 = vadd.f32 %v291, %v339
  %v341 = vpop.f32.mrf.mxu0
  %v342 = vadd.f32 %v293, %v341
  %343 = vmatmul.bf16.gmra.mxu0 %v249
  %v344 = vpop.f32.mrf.mxu0
  %v345 = vadd.f32 %v296, %v344
  %v346 = vpop.f32.mrf.mxu0
  %v347 = vadd.f32 %v298, %v346
  %348 = vmatmul.bf16.gmra.mxu0 %v252
  %v349 = vpop.f32.mrf.mxu0
  %v350 = vadd.f32 %v301, %v349
  %v351 = vpop.f32.mrf.mxu0
  %v352 = vadd.f32 %v303, %v351
  %353 = vmatmul.bf16.gmra.mxu0 %v255
  %v354 = vpop.f32.mrf.mxu0
  %v355 = vadd.f32 %v306, %v354
  %v356 = vpop.f32.mrf.mxu0
  %v357 = vadd.f32 %v308, %v356
  %358 = vdwg.mxu0
  %v359 = vmax.f32 %v320, %v330
  %v360 = vmax.f32 %v322, %v332
  %v361 = vmax.f32 %v325, %v335
  %v362 = vmax.f32 %v327, %v337
  %v363 = vmax.f32 %v359, %v340
  %v364 = vmax.f32 %v360, %v342
  %v365 = vmax.f32 %v361, %v345
  %v366 = vmax.f32 %v362, %v347
  %v367 = vmax.f32 %v363, %v350
  %v368 = vmax.f32 %v364, %v352
  %v369 = vmax.f32 %v365, %v355
  %v370 = vmax.f32 %v366, %v357
  %v371 = vld [vmem:[%s2] sm:$0x1]
  %v373 = vperm.slane %v371, 0
  %v375 = vadd.f32 %v367, %v373
  %v376 = vadd.f32 %v368, %v373
  %v377 = vadd.f32 %v369, %v373
  %v378 = vadd.f32 %v370, %v373
  %v379 = vmax.f32 %v375, 0.0
  %v380 = vmax.f32 %v376, 0.0
  %v381 = vmax.f32 %v377, 0.0
  %v382 = vmax.f32 %v378, 0.0
  %v383 = vpack.c.bf16 %v379, %v379
  %v384 = vpack.c.bf16 %v380, %v380
  %v385 = vpack.c.bf16 %v381, %v381
  %v386 = vpack.c.bf16 %v382, %v382
  %387 = vst [vmem:[%s3] sm:$0xf] %v383
  %388 = vst [vmem:[%s3 + $0x4] sm:$0xf] %v384
  %389 = vst [vmem:[%s3 + $0x8] sm:$0xf] %v385
  %390 = vst [vmem:[%s3 + $0xc] sm:$0xf] %v386
  // Predicated region
  $region14: #{cnn_mnist_forward.4} parent=0 // pred_check
    _
  $region15: #{cnn_mnist_forward.4} parent=0 // pred_check_branch
    %392 = sbr.rel (0) target = $region17
  $region16: #{cnn_mnist_forward.4} parent=0 // pred_region
    _
  $region17: #{cnn_mnist_forward.4} parent=0 // pred_fallthru
    _
  // Predicated region
  $region18: #{cnn_mnist_forward.4} parent=0 // pred_check
    _
  $region19: #{cnn_mnist_forward.4} parent=0 // pred_check_branch
    %394 = sbr.rel (0) target = $region21
  $region20: #{cnn_mnist_forward.4} parent=0 // pred_region
    _
  $region21: #{cnn_mnist_forward.4} parent=0 // pred_fallthru
    _

// kernel: cnn_mnist_forward.5
$region0: #{cnn_mnist_forward.5}
  #allocation0 [shape = 'u32[]', space=smem, size = 0x4, offset = 0x4, fixed_abs, tag = 'smem constant byte address 0x4 - core index']
  #allocation1 [shape = 'u32[72,128]{1,0:T(1,128)}', space=vmem, size = 0x9000, scoped, tag = 'internal scratch']
  %s0 = inlined_call_operand.vmem [shape: bf16[8,320], index: 0, kind: input, shape index: {}]
  %s1 = inlined_call_operand.vmem [shape: bf16[320,128], index: 1, kind: input, shape index: {}]
  %s2 = inlined_call_operand.vmem [shape: f32[1,128], index: 2, kind: input, shape index: {}]
  %s3 = inlined_call_operand.vmem [shape: bf16[128,128], index: 3, kind: input, shape index: {}]
  %s4 = inlined_call_operand.vmem [shape: f32[1,128], index: 4, kind: input, shape index: {}]
  %s5 = inlined_call_operand.vmem [shape: f32[8,128], index: 5, kind: output, shape index: {}]
  %s6 = sld [smem:[#allocation0]]
  $region30: #{cnn_mnist_forward.5} parent=0
    _
  %s8 = ssub.s32 1, %s6
  %s9 = scalar_select 0, %s8, %s6
  // Predicated region
  $region2: #{cnn_mnist_forward.5} parent=0 // pred_check
    _
  $region3: #{cnn_mnist_forward.5} parent=0 // pred_check_branch
    %11 = sbr.rel (0) target = $region5
  $region4: #{cnn_mnist_forward.5} parent=0 // pred_region
    _
  $region5: #{cnn_mnist_forward.5} parent=0 // pred_fallthru
    _
  // Predicated region
  $region6: #{cnn_mnist_forward.5} parent=0 // pred_check
    _
  $region7: #{cnn_mnist_forward.5} parent=0 // pred_check_branch
    %13 = sbr.rel (0) target = $region9
  $region8: #{cnn_mnist_forward.5} parent=0 // pred_region
    _
  $region9: #{cnn_mnist_forward.5} parent=0 // pred_fallthru
    _
  // Predicated region
  $region10: #{cnn_mnist_forward.5} parent=0 // pred_check
    _
  $region11: #{cnn_mnist_forward.5} parent=0 // pred_check_branch
    %15 = sbr.rel (0) target = $region13
  $region12: #{cnn_mnist_forward.5} parent=0 // pred_region
    _
  $region13: #{cnn_mnist_forward.5} parent=0 // pred_fallthru
    _
  // Predicated region
  $region14: #{cnn_mnist_forward.5} parent=0 // pred_check
    _
  $region15: #{cnn_mnist_forward.5} parent=0 // pred_check_branch
    %17 = sbr.rel (0) target = $region17
  $region16: #{cnn_mnist_forward.5} parent=0 // pred_region
    _
  $region17: #{cnn_mnist_forward.5} parent=0 // pred_fallthru
    _
  // Predicated region
  $region18: #{cnn_mnist_forward.5} parent=0 // pred_check
    _
  $region19: #{cnn_mnist_forward.5} parent=0 // pred_check_branch
    %19 = sbr.rel (0) target = $region21
  $region20: #{cnn_mnist_forward.5} parent=0 // pred_region
    _
  $region21: #{cnn_mnist_forward.5} parent=0 // pred_fallthru
    _
  %v21 = vld [vmem:[%s0] sm:$0xff]
  %v22 = vld [vmem:[%s0 + $0x8] sm:$0xf]
  %v23 = vld [vmem:[%s1] sm:$0xf]
  %v24 = vld [vmem:[%s1 + $0x4] sm:$0xf]
  %v25 = vld [vmem:[%s1 + $0x8] sm:$0xf]
  %v26 = vld [vmem:[%s1 + $0xc] sm:$0xf]
  %v27 = vld [vmem:[%s1 + $0x10] sm:$0xf]
  %v28 = vld [vmem:[%s1 + $0x14] sm:$0xf]
  %v29 = vld [vmem:[%s1 + $0x18] sm:$0xf]
  %v30 = vld [vmem:[%s1 + $0x1c] sm:$0xf]
  %v31 = vld [vmem:[%s1 + $0x20] sm:$0xf]
  %v32 = vld [vmem:[%s1 + $0x24] sm:$0xf]
  %v33 = vld [vmem:[%s1 + $0x28] sm:$0xf]
  %v34 = vld [vmem:[%s1 + $0x2c] sm:$0xf]
  %v35 = vld [vmem:[%s1 + $0x30] sm:$0xf]
  %v36 = vld [vmem:[%s1 + $0x34] sm:$0xf]
  %v37 = vld [vmem:[%s1 + $0x38] sm:$0xf]
  %v38 = vld [vmem:[%s1 + $0x3c] sm:$0xf]
  %v39 = vld [vmem:[%s1 + $0x40] sm:$0xf]
  %v40 = vld [vmem:[%s1 + $0x44] sm:$0xf]
  %v41 = vld [vmem:[%s1 + $0x48] sm:$0xf]
  %v42 = vld [vmem:[%s1 + $0x4c] sm:$0xf]
  %v43 = vld [vmem:[%s1 + $0x50] sm:$0xf]
  %v44 = vld [vmem:[%s1 + $0x54] sm:$0xf]
  %v45 = vld [vmem:[%s1 + $0x58] sm:$0xf]
  %v46 = vld [vmem:[%s1 + $0x5c] sm:$0xf]
  %v47 = vld [vmem:[%s1 + $0x60] sm:$0xf]
  %v48 = vld [vmem:[%s1 + $0x64] sm:$0xf]
  %v49 = vld [vmem:[%s1 + $0x68] sm:$0xf]
  %v50 = vld [vmem:[%s1 + $0x6c] sm:$0xf]
  %v51 = vld [vmem:[%s1 + $0x70] sm:$0xf]
  %v52 = vld [vmem:[%s1 + $0x74] sm:$0xf]
  %v53 = vld [vmem:[%s1 + $0x78] sm:$0xf]
  %v54 = vld [vmem:[%s1 + $0x7c] sm:$0xf]
  %v55 = vld [vmem:[%s1 + $0x80] sm:$0xf]
  %v56 = vld [vmem:[%s1 + $0x84] sm:$0xf]
  %v57 = vld [vmem:[%s1 + $0x88] sm:$0xf]
  %v58 = vld [vmem:[%s1 + $0x8c] sm:$0xf]
  %v59 = vld [vmem:[%s1 + $0x90] sm:$0xf]
  %v60 = vld [vmem:[%s1 + $0x94] sm:$0xf]
  %v61 = vld [vmem:[%s1 + $0x98] sm:$0xf]
  %v62 = vld [vmem:[%s1 + $0x9c] sm:$0xf]
  %v63 = vld [vmem:[%s2] sm:$0x1]
  %v65 = vperm.slane %v63, 0
  %v69 = vunpack.c.l.b16 %v21
  %v70 = vunpack.c.h.b16 %v21
  %v71 = vunpack.c.l.b16 %v22
  %v72 = vpack.c.b16 %v69, %v69
  %v73 = vpack.c.b16 %v70, %v70
  %v74 = vpack.c.b16 %v71, %v71
  %v117 = vunpack.c.l.b16 %v23
  %v118 = vunpack.c.l.b16 %v24
  %v119 = vunpack.c.l.b16 %v25
  %v120 = vunpack.c.l.b16 %v26
  %v121 = vunpack.c.l.b16 %v27
  %v122 = vunpack.c.l.b16 %v28
  %v123 = vunpack.c.l.b16 %v29
  %v124 = vunpack.c.l.b16 %v30
  %v125 = vunpack.c.l.b16 %v31
  %v126 = vunpack.c.l.b16 %v32
  %v127 = vunpack.c.l.b16 %v33
  %v128 = vunpack.c.l.b16 %v34
  %v129 = vunpack.c.l.b16 %v35
  %v130 = vunpack.c.l.b16 %v36
  %v131 = vunpack.c.l.b16 %v37
  %v132 = vunpack.c.l.b16 %v38
  %v133 = vunpack.c.l.b16 %v39
  %v134 = vunpack.c.l.b16 %v40
  %v135 = vunpack.c.l.b16 %v41
  %v136 = vunpack.c.l.b16 %v42
  %v137 = vunpack.c.l.b16 %v43
  %v138 = vunpack.c.l.b16 %v44
  %v139 = vunpack.c.l.b16 %v45
  %v140 = vunpack.c.l.b16 %v46
  %v141 = vunpack.c.l.b16 %v47
  %v142 = vunpack.c.l.b16 %v48
  %v143 = vunpack.c.l.b16 %v49
  %v144 = vunpack.c.l.b16 %v50
  %v145 = vunpack.c.l.b16 %v51
  %v146 = vunpack.c.l.b16 %v52
  %v147 = vunpack.c.l.b16 %v53
  %v148 = vunpack.c.l.b16 %v54
  %v149 = vunpack.c.l.b16 %v55
  %v150 = vunpack.c.l.b16 %v56
  %v151 = vunpack.c.l.b16 %v57
  %v152 = vunpack.c.l.b16 %v58
  %v153 = vunpack.c.l.b16 %v59
  %v154 = vunpack.c.l.b16 %v60
  %v155 = vunpack.c.l.b16 %v61
  %v156 = vunpack.c.l.b16 %v62
  %v157 = vpack.c.b16 %v118, %v117
  %v158 = vpack.c.b16 %v120, %v119
  %v159 = vpack.c.b16 %v122, %v121
  %v160 = vpack.c.b16 %v124, %v123
  %v161 = vpack.c.b16 %v126, %v125
  %v162 = vpack.c.b16 %v128, %v127
  %v163 = vpack.c.b16 %v130, %v129
  %v164 = vpack.c.b16 %v132, %v131
  %v165 = vpack.c.b16 %v134, %v133
  %v166 = vpack.c.b16 %v136, %v135
  %v167 = vpack.c.b16 %v138, %v137
  %v168 = vpack.c.b16 %v140, %v139
  %v169 = vpack.c.b16 %v142, %v141
  %v170 = vpack.c.b16 %v144, %v143
  %v171 = vpack.c.b16 %v146, %v145
  %v172 = vpack.c.b16 %v148, %v147
  %v173 = vpack.c.b16 %v150, %v149
  %v174 = vpack.c.b16 %v152, %v151
  %v175 = vpack.c.b16 %v154, %v153
  %v176 = vpack.c.b16 %v156, %v155
  %vm197 = vcmask 523264
  %v199 = vsel %vm197, %v74, 0
  %201 = vmatpush.bf16.msra.mxu0 %v164
  %202 = vmatpush.bf16.msra.mxu0 %v163
  %203 = vmatpush.bf16.msra.mxu0 %v162
  %204 = vmatpush.bf16.msra.mxu0 %v161
  %205 = vmatpush.bf16.msra.mxu0 %v160
  %206 = vmatpush.bf16.msra.mxu0 %v159
  %207 = vmatpush.bf16.msra.mxu0 %v158
  %208 = vmatpush.bf16.msra.mxu0 %v157
  %209 = vmatmul.bf16.gmra.mxu0 %v72
  %v210 = vpop.f32.mrf.mxu0
  %v211 = vadd.f32 %v65, %v210
  %v212 = vpop.f32.mrf.mxu0
  %213 = vdwg.mxu0
  %214 = vmatpush.bf16.msra.mxu0 %v172
  %215 = vmatpush.bf16.msra.mxu0 %v171
  %216 = vmatpush.bf16.msra.mxu0 %v170
  %217 = vmatpush.bf16.msra.mxu0 %v169
  %218 = vmatpush.bf16.msra.mxu0 %v168
  %219 = vmatpush.bf16.msra.mxu0 %v167
  %220 = vmatpush.bf16.msra.mxu0 %v166
  %221 = vmatpush.bf16.msra.mxu0 %v165
  %222 = vmatmul.bf16.gmra.mxu0 %v73
  %v223 = vpop.f32.mrf.mxu0
  %v224 = vadd.f32 %v211, %v223
  %v225 = vpop.f32.mrf.mxu0
  %226 = vdwg.mxu0
  %227 = vmatpush.bf16.msra.mxu0 0
  %228 = vmatpush.bf16.msra.mxu0 0
  %229 = vmatpush.bf16.msra.mxu0 0
  %230 = vmatpush.bf16.msra.mxu0 0
  %231 = vmatpush.bf16.msra.mxu0 %v176
  %232 = vmatpush.bf16.msra.mxu0 %v175
  %233 = vmatpush.bf16.msra.mxu0 %v174
  %234 = vmatpush.bf16.msra.mxu0 %v173
  %235 = vmatmul.bf16.gmra.mxu0 %v199
  %v236 = vpop.f32.mrf.mxu0
  %v237 = vadd.f32 %v224, %v236
  %v238 = vpop.f32.mrf.mxu0
  %239 = vdwg.mxu0
  %v240 = vmax.f32 %v237, 0.0
  %v241 = vpack.c.bf16 %v240, %v240
  %v242 = vld [vmem:[%s3] sm:$0xf]
  %v243 = vld [vmem:[%s3 + $0x4] sm:$0xf]
  %v244 = vld [vmem:[%s3 + $0x8] sm:$0xf]
  %v245 = vld [vmem:[%s3 + $0xc] sm:$0xf]
  %v246 = vld [vmem:[%s3 + $0x10] sm:$0xf]
  %v247 = vld [vmem:[%s3 + $0x14] sm:$0xf]
  %v248 = vld [vmem:[%s3 + $0x18] sm:$0xf]
  %v249 = vld [vmem:[%s3 + $0x1c] sm:$0xf]
  %v250 = vld [vmem:[%s3 + $0x20] sm:$0xf]
  %v251 = vld [vmem:[%s3 + $0x24] sm:$0xf]
  %v252 = vld [vmem:[%s3 + $0x28] sm:$0xf]
  %v253 = vld [vmem:[%s3 + $0x2c] sm:$0xf]
  %v254 = vld [vmem:[%s3 + $0x30] sm:$0xf]
  %v255 = vld [vmem:[%s3 + $0x34] sm:$0xf]
  %v256 = vld [vmem:[%s3 + $0x38] sm:$0xf]
  %v257 = vld [vmem:[%s3 + $0x3c] sm:$0xf]
  %v258 = vld [vmem:[%s4] sm:$0x1]
  %v260 = vperm.slane %v258, 0
  %v278 = vunpack.c.l.b16 %v242
  %v279 = vunpack.c.l.b16 %v243
  %v280 = vunpack.c.l.b16 %v244
  %v281 = vunpack.c.l.b16 %v245
  %v282 = vunpack.c.l.b16 %v246
  %v283 = vunpack.c.l.b16 %v247
  %v284 = vunpack.c.l.b16 %v248
  %v285 = vunpack.c.l.b16 %v249
  %v286 = vunpack.c.l.b16 %v250
  %v287 = vunpack.c.l.b16 %v251
  %v288 = vunpack.c.l.b16 %v252
  %v289 = vunpack.c.l.b16 %v253
  %v290 = vunpack.c.l.b16 %v254
  %v291 = vunpack.c.l.b16 %v255
  %v292 = vunpack.c.l.b16 %v256
  %v293 = vunpack.c.l.b16 %v257
  %v294 = vpack.c.b16 %v279, %v278
  %v295 = vpack.c.b16 %v281, %v280
  %v296 = vpack.c.b16 %v283, %v282
  %v297 = vpack.c.b16 %v285, %v284
  %v298 = vpack.c.b16 %v287, %v286
  %v299 = vpack.c.b16 %v289, %v288
  %v300 = vpack.c.b16 %v291, %v290
  %v301 = vpack.c.b16 %v293, %v292
  %310 = vmatpush.bf16.msra.mxu0 %v301
  %311 = vmatpush.bf16.msra.mxu0 %v300
  %312 = vmatpush.bf16.msra.mxu0 %v299
  %313 = vmatpush.bf16.msra.mxu0 %v298
  %314 = vmatpush.bf16.msra.mxu0 %v297
  %315 = vmatpush.bf16.msra.mxu0 %v296
  %316 = vmatpush.bf16.msra.mxu0 %v295
  %317 = vmatpush.bf16.msra.mxu0 %v294
  %318 = vmatmul.bf16.gmra.mxu0 %v241
  %v319 = vpop.f32.mrf.mxu0
  %v320 = vadd.f32 %v260, %v319
  %v321 = vpop.f32.mrf.mxu0
  %322 = vdwg.mxu0
  %v323 = vlaneseq
  %v324 = vand.u32 %v323, 127
  %vm325 = vcmp.lt.s32.totalorder %v324, 10
  %v326 = vsel %vm325, %v320, -1e+30
  %327 = vmax.xlane.f32.xlu0 %v326
  %v328 = vpop.xlane.xlu0 %327
  %v329 = vsub.f32 %v326, %v328
  %v330 = vmul.f32 %v329, 1.442695
  %v331 = vpow.pop %v330
  %v332 = vsel %vm325, %v331, 0.0
  %333 = vadd.xlane.f32.xlu0 %v332
  %v334 = vpop.xlane.xlu0 %333
  %v335 = vlog2.pop %v334
  %v336 = vmul.f32 %v335, 0.6931472
  %v337 = vsub.f32 %v329, %v336
  %v338 = vsel %vm325, %v337, 0.0
  %339 = vst [vmem:[%s5] sm:$0xff] %v338
  // Predicated region
  $region22: #{cnn_mnist_forward.5} parent=0 // pred_check
    _
  $region23: #{cnn_mnist_forward.5} parent=0 // pred_check_branch
    %341 = sbr.rel (0) target = $region25
  $region24: #{cnn_mnist_forward.5} parent=0 // pred_region
    _
  $region25: #{cnn_mnist_forward.5} parent=0 // pred_fallthru
    _
  // Predicated region
  $region26: #{cnn_mnist_forward.5} parent=0 // pred_check
    _
  $region27: #{cnn_mnist_forward.5} parent=0 // pred_check_branch
    %343 = sbr.rel (0) target = $region29
  $region28: #{cnn_mnist_forward.5} parent=0 // pred_region
    _
  $region29: #{cnn_mnist_forward.5} parent=0 // pred_fallthru
    _

</llo_original>
